<compile_context>
chip_gen: v7x
topology: tpu7x:2x2x1
jax: 0.10.0
libtpu: 0.0.40
codegen_flags: <defaults>
</compile_context>

<pallas_src>
import functools

import numpy as np

import jax
import jax.numpy as jnp
from jax.experimental import pallas as pl
from jax.experimental.pallas import tpu as pltpu


# --------------------------------------------------------------------------
# Config mirroring the PyTorch module's __init__ expectations.
# --------------------------------------------------------------------------
CONFIG = {
    "img_shp": [4, 16, 16],        # [C, H, W]
    "window_size": 16,
    "latent_size": 32,
    "disable_rnn_proj": False,     # -> forward uses cat([state, conv_feat])
    "concat_prediction_size": 0,   # <= 0  => state_proj out = latent_size + 1
    "activation": "relu",
    "dense_normalization": "none",
}
OUTPUT_SIZE = 10                   # out_proj target (only used in get_output)


# --------------------------------------------------------------------------
# Weight-side preprocessing: exact dense ("unrolled") form of a Conv2d.
# --------------------------------------------------------------------------
def conv2d_as_dense(w_oihw, in_hw, *, stride, pad, in_layout):
    """Exact dense-matrix form of a zero-padded Conv2d with PyTorch OIHW weights.

    Returns (M, OH, OW) with M of shape (I*H*W, OH*OW*O) such that
        y_flat = x_flat @ M
    where x_flat flattens one image in `in_layout` ("chw" or "hwc") order and
    y_flat is flattened in (oh, ow, o) i.e. HWC order.  Building M is a
    one-time init cost; at run time the conv becomes a single 128-aligned MXU
    matmul with no im2col / padding / layout glue and no strided slicing.
    """
    w = np.asarray(w_oihw, dtype=np.float32)
    O, I, KH, KW = w.shape
    H, W = in_hw
    OH = (H + 2 * pad - KH) // stride + 1
    OW = (W + 2 * pad - KW) // stride + 1
    M = np.zeros((I * H * W, OH * OW * O), dtype=np.float32)
    for oh in range(OH):
        for ow in range(OW):
            out_base = (oh * OW + ow) * O
            for kh in range(KH):
                h = oh * stride + kh - pad
                if not 0 <= h < H:
                    continue
                for kw in range(KW):
                    wc = ow * stride + kw - pad
                    if not 0 <= wc < W:
                        continue
                    for ci in range(I):
                        if in_layout == "chw":
                            in_idx = (ci * H + h) * W + wc
                        else:                              # "hwc"
                            in_idx = (h * W + wc) * I + ci
                        M[in_idx, out_base:out_base + O] = w[:, ci, kh, kw]
    return M, OH, OW


# --------------------------------------------------------------------------
# Parameter construction (deterministic, synthetic) + kernel-ready packing.
# --------------------------------------------------------------------------
def init_params(key, config):
    C = config["img_shp"][0]
    L = config["latent_size"]
    out_state = (L + 1 if config["concat_prediction_size"] <= 0
                 else config["concat_prediction_size"] + 1)
    state_in = L if config["disable_rnn_proj"] else 2 * L

    ks = jax.random.split(key, 10)

    def w(k, shape, fan_in):
        return jax.random.normal(k, shape, jnp.float32) / jnp.sqrt(fan_in)

    p = {}
    # conv encoder ("crop_feat"): C -> 8 -> 16, then dense -> latent_size.
    p["conv1_w"] = w(ks[0], (8, C, 3, 3), C * 9)
    p["conv1_b"] = 0.1 * jax.random.normal(ks[1], (8,), jnp.float32)
    p["conv2_w"] = w(ks[2], (16, 8, 3, 3), 8 * 9)
    p["conv2_b"] = 0.1 * jax.random.normal(ks[3], (16,), jnp.float32)
    flat = 16 * 4 * 4                      # 16x16 input, two stride-2 convs
    p["enc_fc_w"] = w(ks[4], (flat, L), flat)
    p["enc_fc_b"] = 0.1 * jax.random.normal(ks[5], (L,), jnp.float32)

    # state_proj dense (input = cat([state, feat]) unless disable_rnn_proj).
    p["sp_w"] = w(ks[6], (state_in, out_state), state_in)
    p["sp_b"] = 0.1 * jax.random.normal(ks[7], (out_state,), jnp.float32)

    # out_proj (get_output path, not exercised by forward()).
    p["op_w"] = w(ks[8], (L, OUTPUT_SIZE), L)
    p["op_b"] = 0.1 * jax.random.normal(ks[9], (OUTPUT_SIZE,), jnp.float32)
    return p


def prepare_kernel_params(raw, config):
    """One-time init-time preprocessing: unroll the convs into dense matrices,
    broadcast their biases over spatial positions, split the state_proj weight
    into its cat() halves, and cast the MXU operands to bf16."""
    C, H, W = config["img_shp"]
    L = config["latent_size"]

    m1, oh1, ow1 = conv2d_as_dense(raw["conv1_w"], (H, W), stride=2, pad=1,
                                   in_layout="chw")   # consumes NCHW flatten
    m2, oh2, ow2 = conv2d_as_dense(raw["conv2_w"], (oh1, ow1), stride=2, pad=1,
                                   in_layout="hwc")   # consumes conv1 HWC out

    kp = {
        # f32 copies are kept only for the correctness checks in __main__.
        "m1_f32": jnp.asarray(m1, jnp.float32),
        "m2_f32": jnp.asarray(m2, jnp.float32),
        # bf16 MXU operands.
        "m1": jnp.asarray(m1, jnp.bfloat16),
        "m2": jnp.asarray(m2, jnp.bfloat16),
        "fc_w": raw["enc_fc_w"].astype(jnp.bfloat16),
        # f32 epilogue terms, broadcast to the flattened (h, w, c) layout.
        "b1": jnp.tile(raw["conv1_b"], oh1 * ow1).reshape(1, -1),
        "b2": jnp.tile(raw["conv2_b"], oh2 * ow2).reshape(1, -1),
        "fc_b": raw["enc_fc_b"].reshape(1, -1),
        "sp_b": raw["sp_b"].reshape(1, -1),
        # out_proj stays f32 (tiny; only used by get_output()).
        "op_w": raw["op_w"],
        "op_b": raw["op_b"],
    }

    out_state = raw["sp_w"].shape[1]
    if config["disable_rnn_proj"]:
        # state is ignored in this branch; model it exactly with a zero weight
        # for the state half so the same fused kernel covers both branches.
        kp["sp_ws"] = jnp.zeros((L, out_state), jnp.bfloat16)
        kp["sp_wf"] = raw["sp_w"].astype(jnp.bfloat16)
    else:
        kp["sp_ws"] = raw["sp_w"][:L].astype(jnp.bfloat16)
        kp["sp_wf"] = raw["sp_w"][L:].astype(jnp.bfloat16)
    return kp


# --------------------------------------------------------------------------
# The fused forward kernel.
# --------------------------------------------------------------------------
def _fused_forward_kernel(x_ref, state_ref, m1_ref, b1_ref, m2_ref, b2_ref,
                          fc_w_ref, fc_b_ref, sp_ws_ref, sp_wf_ref, sp_b_ref,
                          o_ref):
    """conv1 -> ReLU -> conv2 -> ReLU -> enc dense -> fused cat+Linear+ReLU.

    All intermediates stay in VMEM/vregs (never written to HBM); MXU operands
    are bf16 with f32 accumulation; bias/ReLU epilogues are f32.
    """
    bf16 = jnp.bfloat16
    f32 = jnp.float32

    # conv1 (dense-unrolled 3x3 / stride-2 / pad-1 conv) + bias + ReLU.
    x = x_ref[...].astype(bf16)
    r1 = jnp.dot(x, m1_ref[...], preferred_element_type=f32)
    r1 = jnp.maximum(r1 + b1_ref[...], 0.0)

    # conv2 + bias + ReLU.
    r2 = jnp.dot(r1.astype(bf16), m2_ref[...], preferred_element_type=f32)
    r2 = jnp.maximum(r2 + b2_ref[...], 0.0)

    # encoder dense -> latent features (no trailing activation).
    feat = jnp.dot(r2.astype(bf16), fc_w_ref[...], preferred_element_type=f32)
    feat = feat + fc_b_ref[...]

    # state_proj(cat([state, feat], -1)):
    #   cat([s, f]) @ W == s @ W[:L] + f @ W[L:]   (single f32 accumulator;
    #   avoids a lane-dim concatenate of two 32-wide tiles).
    acc = jnp.dot(state_ref[...].astype(bf16), sp_ws_ref[...],
                  preferred_element_type=f32)
    acc = acc + jnp.dot(feat.astype(bf16), sp_wf_ref[...],
                        preferred_element_type=f32)
    acc = jnp.maximum(acc + sp_b_ref[...], 0.0)
    # Only HBM store of the whole forward: one tiny (rows, latent+1) tile.
    o_ref[...] = acc.astype(o_ref.dtype)


def _fused_forward_call(x_flat, state, p):
    B, K0 = x_flat.shape
    L = state.shape[1]
    N1 = p["m1"].shape[1]
    N2 = p["m2"].shape[1]
    NF = p["fc_w"].shape[1]
    NO = p["sp_wf"].shape[1]

    # Rows (= batch) are the only gridded axis.  At B=2 this is one block; at
    # larger batch the "parallel" axis shards across v7x's two TensorCores and
    # keeps the per-step working set far under the 32 MiB scoped VMEM limit.
    bm = B if B <= 512 else 512
    grid_m = pl.cdiv(B, bm)

    def row_spec(n):
        return pl.BlockSpec((bm, n), lambda i: (i, 0))

    def rep_spec(m, n):
        return pl.BlockSpec((m, n), lambda i: (0, 0))

    operands = (x_flat, state, p["m1"], p["b1"], p["m2"], p["b2"],
                p["fc_w"], p["fc_b"], p["sp_ws"], p["sp_wf"], p["sp_b"])
    flops = 2 * B * (K0 * N1 + N1 * N2 + N2 * NF + L * NO + NF * NO)
    bytes_accessed = (sum(int(a.size) * a.dtype.itemsize for a in operands)
                      + B * NO * 4)

    return pl.pallas_call(
        _fused_forward_kernel,
        out_shape=jax.ShapeDtypeStruct((B, NO), jnp.float32),
        grid=(grid_m,),
        in_specs=[
            row_spec(K0),      # x rows (CHW-flattened image)
            row_spec(L),       # state rows
            rep_spec(K0, N1),  # conv1 as dense matrix (bf16)
            rep_spec(1, N1),   # conv1 bias, spatially broadcast (f32)
            rep_spec(N1, N2),  # conv2 as dense matrix (bf16)
            rep_spec(1, N2),   # conv2 bias (f32)
            rep_spec(N2, NF),  # encoder dense weight (bf16)
            rep_spec(1, NF),   # encoder dense bias (f32)
            rep_spec(L, NO),   # state_proj weight, state half (bf16)
            rep_spec(NF, NO),  # state_proj weight, feature half (bf16)
            rep_spec(1, NO),   # state_proj bias (f32)
        ],
        out_specs=row_spec(NO),
        compiler_params=pltpu.CompilerParams(
            dimension_semantics=("parallel",)),
        cost_estimate=pl.CostEstimate(flops=flops, transcendentals=0,
                                      bytes_accessed=bytes_accessed),
    )(*operands)


# --------------------------------------------------------------------------
# Module-level forward / get_output (PyTorch semantics).
# --------------------------------------------------------------------------
def image_state_projector_forward(params, x_nchw, state, config):
    """forward(x, state): conv features + state_proj(cat([state, feat]))."""
    del config  # branch behaviour is baked into the prepared weights
    B = x_nchw.shape[0]
    # CHW flatten straight off the NCHW input: the dense conv operator was
    # built to consume exactly this order, so no NCHW->NHWC transpose is done.
    x_flat = x_nchw.reshape(B, -1)
    return _fused_forward_call(x_flat, state, params)


def _linear_kernel(x_ref, w_ref, b_ref, o_ref):
    acc = jnp.dot(x_ref[...], w_ref[...], preferred_element_type=jnp.float32)
    o_ref[...] = (acc + b_ref[...]).astype(o_ref.dtype)


def pallas_linear(x, w, b):
    """Single-block y = x @ w + b (only used by get_output)."""
    M, K = x.shape
    N = w.shape[1]
    return pl.pallas_call(
        _linear_kernel,
        out_shape=jax.ShapeDtypeStruct((M, N), jnp.float32),
        grid=(1,),
        in_specs=[pl.BlockSpec((M, K), lambda i: (0, 0)),
                  pl.BlockSpec((K, N), lambda i: (0, 0)),
                  pl.BlockSpec((1, N), lambda i: (0, 0))],
        out_specs=pl.BlockSpec((M, N), lambda i: (0, 0)),
    )(x, w, b.reshape(1, N))


def get_output(params, accumulator):
    """Mirrors ImageStateProjector.get_output(acc) = out_proj(acc)."""
    # TODO(synk): get_encoder internals unknown; out_proj is modeled as a bare
    # Linear (no trailing activation), per review feedback.
    return pallas_linear(accumulator, params["op_w"], params["op_b"])


# --------------------------------------------------------------------------
if __name__ == "__main__":
    key = jax.random.PRNGKey(0)
    k_param, k_x, k_state = jax.random.split(key, 3)

    raw = init_params(k_param, CONFIG)
    params = prepare_kernel_params(raw, CONFIG)

    B = 2
    C, H, W = CONFIG["img_shp"]
    L = CONFIG["latent_size"]

    x = jax.random.normal(k_x, (B, C, H, W), jnp.float32)        # NCHW
    state = jax.random.normal(k_state, (B, L), jnp.float32)

    fwd = jax.jit(functools.partial(image_state_projector_forward,
                                    config=CONFIG))
    out = jax.block_until_ready(fwd(params, x, state))

    expected_out_dim = (L + 1 if CONFIG["concat_prediction_size"] <= 0
                        else CONFIG["concat_prediction_size"] + 1)
    assert out.shape == (B, expected_out_dim), out.shape
    assert bool(jnp.all(jnp.isfinite(out)))

    # ---- check 1: dense-unrolled conv matrices reproduce Conv2d (f32) ------
    hp = jax.lax.Precision.HIGHEST

    def conv_ref(inp, w, b, stride, pad):
        y = jax.lax.conv_general_dilated(
            inp, w, (stride, stride), ((pad, pad), (pad, pad)),
            dimension_numbers=("NCHW", "OIHW", "NCHW"), precision=hp)
        return y + b.reshape(1, -1, 1, 1)

    x_flat = x.reshape(B, -1)
    h1_ref = conv_ref(x, raw["conv1_w"], raw["conv1_b"], 2, 1)   # (B,8,8,8)
    h1_dense = jnp.dot(x_flat, params["m1_f32"], precision=hp) + params["b1"]
    assert jnp.allclose(h1_dense,
                        jnp.transpose(h1_ref, (0, 2, 3, 1)).reshape(B, -1),
                        atol=1e-4, rtol=1e-4)

    h2_ref = conv_ref(jax.nn.relu(h1_ref), raw["conv2_w"], raw["conv2_b"], 2, 1)
    h2_dense = (jnp.dot(jax.nn.relu(h1_dense), params["m2_f32"], precision=hp)
                + params["b2"])
    assert jnp.allclose(h2_dense,
                        jnp.transpose(h2_ref, (0, 2, 3, 1)).reshape(B, -1),
                        atol=1e-4, rtol=1e-4)

    # ---- check 2: kernel matches the same math executed by XLA (bf16 MXU ---
    # ---- operands, f32 accumulation); only summation order may differ. -----
    def mimic_ref(p, xf, st):
        bf, f32 = jnp.bfloat16, jnp.float32
        r1 = jax.nn.relu(jnp.dot(xf.astype(bf), p["m1"],
                                 preferred_element_type=f32) + p["b1"])
        r2 = jax.nn.relu(jnp.dot(r1.astype(bf), p["m2"],
                                 preferred_element_type=f32) + p["b2"])
        feat = jnp.dot(r2.astype(bf), p["fc_w"],
                       preferred_element_type=f32) + p["fc_b"]
        acc = jnp.dot(st.astype(bf), p["sp_ws"], preferred_element_type=f32)
        acc = acc + jnp.dot(feat.astype(bf), p["sp_wf"],
                            preferred_element_type=f32)
        return jax.nn.relu(acc + p["sp_b"])

    ref_out = mimic_ref(params, x_flat, state)
    assert jnp.allclose(out, ref_out, atol=1e-2, rtol=1e-2), (
        float(jnp.max(jnp.abs(out - ref_out))))

    print("KERNEL_OK")
</pallas_src>

<mosaic_0001>
module attributes {stable_mosaic.version = 11 : i64} {
  func.func @_fused_forward_kernel(%arg0: i32, %arg1: memref<2x1024xf32, #tpu.memory_space<vmem>>, %arg2: memref<2x32xf32, #tpu.memory_space<vmem>>, %arg3: memref<1024x512xbf16, #tpu.memory_space<vmem>>, %arg4: memref<1x512xf32, #tpu.memory_space<vmem>>, %arg5: memref<512x256xbf16, #tpu.memory_space<vmem>>, %arg6: memref<1x256xf32, #tpu.memory_space<vmem>>, %arg7: memref<256x32xbf16, #tpu.memory_space<vmem>>, %arg8: memref<1x32xf32, #tpu.memory_space<vmem>>, %arg9: memref<32x33xbf16, #tpu.memory_space<vmem>>, %arg10: memref<32x33xbf16, #tpu.memory_space<vmem>>, %arg11: memref<1x33xf32, #tpu.memory_space<vmem>>, %arg12: memref<2x33xf32, #tpu.memory_space<vmem>>) attributes {dimension_semantics = [#tpu.dimension_semantics<parallel>], iteration_bounds = array<i64: 1>, scalar_prefetch = 0 : i64, scratch_operands = 0 : i64, tpu.core_type = #tpu.core_type<tc>, window_params = [{transform_indices = @transform_0, window_bounds = array<i64: 2, 1024>}, {transform_indices = @transform_1, window_bounds = array<i64: 2, 32>}, {pipeline_mode = #tpu.pipeline_mode<synchronous>, transform_indices = @transform_2, window_bounds = array<i64: 1024, 512>}, {pipeline_mode = #tpu.pipeline_mode<synchronous>, transform_indices = @transform_3, window_bounds = array<i64: 1, 512>}, {pipeline_mode = #tpu.pipeline_mode<synchronous>, transform_indices = @transform_4, window_bounds = array<i64: 512, 256>}, {pipeline_mode = #tpu.pipeline_mode<synchronous>, transform_indices = @transform_5, window_bounds = array<i64: 1, 256>}, {pipeline_mode = #tpu.pipeline_mode<synchronous>, transform_indices = @transform_6, window_bounds = array<i64: 256, 32>}, {pipeline_mode = #tpu.pipeline_mode<synchronous>, transform_indices = @transform_7, window_bounds = array<i64: 1, 32>}, {pipeline_mode = #tpu.pipeline_mode<synchronous>, transform_indices = @transform_8, window_bounds = array<i64: 32, 33>}, {pipeline_mode = #tpu.pipeline_mode<synchronous>, transform_indices = @transform_9, window_bounds = array<i64: 32, 33>}, {pipeline_mode = #tpu.pipeline_mode<synchronous>, transform_indices = @transform_10, window_bounds = array<i64: 1, 33>}, {transform_indices = @transform_11, window_bounds = array<i64: 2, 33>}]} {
    %c0 = arith.constant 0 : index
    %c0_0 = arith.constant 0 : index
    %0 = vector.load %arg1[%c0, %c0_0] : memref<2x1024xf32, #tpu.memory_space<vmem>>, vector<2x1024xf32>
    %1 = arith.truncf %0 : vector<2x1024xf32> to vector<2x1024xbf16>
    %c0_1 = arith.constant 0 : index
    %c0_2 = arith.constant 0 : index
    %2 = vector.load %arg3[%c0_1, %c0_2] : memref<1024x512xbf16, #tpu.memory_space<vmem>>, vector<1024x512xbf16>
    %cst = arith.constant dense<0.000000e+00> : vector<2x512xf32>
    %3 = tpu.matmul %1, %2, %cst {dimension_numbers = #tpu.dot_dimension_numbers<[1], [0], [0], [1], [0, 0, 1, 1], [], []>} : vector<2x1024xbf16>, vector<1024x512xbf16>, vector<2x512xf32> -> vector<2x512xf32>
    %c0_3 = arith.constant 0 : index
    %c0_4 = arith.constant 0 : index
    %4 = vector.load %arg4[%c0_3, %c0_4] : memref<1x512xf32, #tpu.memory_space<vmem>>, vector<1x512xf32>
    %5 = vector.broadcast %4 : vector<1x512xf32> to vector<2x512xf32>
    %6 = arith.addf %3, %5 : vector<2x512xf32>
    %cst_5 = arith.constant 0.000000e+00 : f32
    %7 = vector.broadcast %cst_5 : f32 to vector<2x512xf32>
    %8 = arith.maximumf %6, %7 : vector<2x512xf32>
    %9 = arith.truncf %8 : vector<2x512xf32> to vector<2x512xbf16>
    %c0_6 = arith.constant 0 : index
    %c0_7 = arith.constant 0 : index
    %10 = vector.load %arg5[%c0_6, %c0_7] : memref<512x256xbf16, #tpu.memory_space<vmem>>, vector<512x256xbf16>
    %cst_8 = arith.constant dense<0.000000e+00> : vector<2x256xf32>
    %11 = tpu.matmul %9, %10, %cst_8 {dimension_numbers = #tpu.dot_dimension_numbers<[1], [0], [0], [1], [0, 0, 1, 1], [], []>} : vector<2x512xbf16>, vector<512x256xbf16>, vector<2x256xf32> -> vector<2x256xf32>
    %c0_9 = arith.constant 0 : index
    %c0_10 = arith.constant 0 : index
    %12 = vector.load %arg6[%c0_9, %c0_10] : memref<1x256xf32, #tpu.memory_space<vmem>>, vector<1x256xf32>
    %13 = vector.broadcast %12 : vector<1x256xf32> to vector<2x256xf32>
    %14 = arith.addf %11, %13 : vector<2x256xf32>
    %cst_11 = arith.constant 0.000000e+00 : f32
    %15 = vector.broadcast %cst_11 : f32 to vector<2x256xf32>
    %16 = arith.maximumf %14, %15 : vector<2x256xf32>
    %17 = arith.truncf %16 : vector<2x256xf32> to vector<2x256xbf16>
    %c0_12 = arith.constant 0 : index
    %c0_13 = arith.constant 0 : index
    %18 = vector.load %arg7[%c0_12, %c0_13] : memref<256x32xbf16, #tpu.memory_space<vmem>>, vector<256x32xbf16>
    %cst_14 = arith.constant dense<0.000000e+00> : vector<2x32xf32>
    %19 = tpu.matmul %17, %18, %cst_14 {dimension_numbers = #tpu.dot_dimension_numbers<[1], [0], [0], [1], [0, 0, 1, 1], [], []>} : vector<2x256xbf16>, vector<256x32xbf16>, vector<2x32xf32> -> vector<2x32xf32>
    %c0_15 = arith.constant 0 : index
    %c0_16 = arith.constant 0 : index
    %20 = vector.load %arg8[%c0_15, %c0_16] : memref<1x32xf32, #tpu.memory_space<vmem>>, vector<1x32xf32>
    %21 = vector.broadcast %20 : vector<1x32xf32> to vector<2x32xf32>
    %22 = arith.addf %19, %21 : vector<2x32xf32>
    %c0_17 = arith.constant 0 : index
    %c0_18 = arith.constant 0 : index
    %23 = vector.load %arg2[%c0_17, %c0_18] : memref<2x32xf32, #tpu.memory_space<vmem>>, vector<2x32xf32>
    %24 = arith.truncf %23 : vector<2x32xf32> to vector<2x32xbf16>
    %c0_19 = arith.constant 0 : index
    %c0_20 = arith.constant 0 : index
    %25 = vector.load %arg9[%c0_19, %c0_20] : memref<32x33xbf16, #tpu.memory_space<vmem>>, vector<32x33xbf16>
    %cst_21 = arith.constant dense<0.000000e+00> : vector<2x33xf32>
    %26 = tpu.matmul %24, %25, %cst_21 {dimension_numbers = #tpu.dot_dimension_numbers<[1], [0], [0], [1], [0, 0, 1, 1], [], []>} : vector<2x32xbf16>, vector<32x33xbf16>, vector<2x33xf32> -> vector<2x33xf32>
    %27 = arith.truncf %22 : vector<2x32xf32> to vector<2x32xbf16>
    %c0_22 = arith.constant 0 : index
    %c0_23 = arith.constant 0 : index
    %28 = vector.load %arg10[%c0_22, %c0_23] : memref<32x33xbf16, #tpu.memory_space<vmem>>, vector<32x33xbf16>
    %cst_24 = arith.constant dense<0.000000e+00> : vector<2x33xf32>
    %29 = tpu.matmul %27, %28, %cst_24 {dimension_numbers = #tpu.dot_dimension_numbers<[1], [0], [0], [1], [0, 0, 1, 1], [], []>} : vector<2x32xbf16>, vector<32x33xbf16>, vector<2x33xf32> -> vector<2x33xf32>
    %30 = arith.addf %26, %29 : vector<2x33xf32>
    %c0_25 = arith.constant 0 : index
    %c0_26 = arith.constant 0 : index
    %31 = vector.load %arg11[%c0_25, %c0_26] : memref<1x33xf32, #tpu.memory_space<vmem>>, vector<1x33xf32>
    %32 = vector.broadcast %31 : vector<1x33xf32> to vector<2x33xf32>
    %33 = arith.addf %30, %32 : vector<2x33xf32>
    %cst_27 = arith.constant 0.000000e+00 : f32
    %34 = vector.broadcast %cst_27 : f32 to vector<2x33xf32>
    %35 = arith.maximumf %33, %34 : vector<2x33xf32>
    %c0_28 = arith.constant 0 : index
    %c0_29 = arith.constant 0 : index
    %36 = vector.load %arg12[%c0_28, %c0_29] : memref<2x33xf32, #tpu.memory_space<vmem>>, vector<2x33xf32>
    tpu.vector_store %arg12[%c0_28, %c0_29], %35 {strides = array<i32>} : memref<2x33xf32, #tpu.memory_space<vmem>>, vector<2x33xf32>,
    return
  }
  func.func @transform_0(%arg0: i32) -> (i32, i32) {
    %c0_i32 = arith.constant 0 : i32
    %c0_i32_0 = arith.constant 0 : i32
    return %arg0, %c0_i32 : i32, i32
  }
  func.func @transform_1(%arg0: i32) -> (i32, i32) {
    %c0_i32 = arith.constant 0 : i32
    %c0_i32_0 = arith.constant 0 : i32
    return %arg0, %c0_i32 : i32, i32
  }
  func.func @transform_2(%arg0: i32) -> (i32, i32) {
    %c0_i32 = arith.constant 0 : i32
    %c0_i32_0 = arith.constant 0 : i32
    %c0_i32_1 = arith.constant 0 : i32
    return %c0_i32, %c0_i32_0 : i32, i32
  }
  func.func @transform_3(%arg0: i32) -> (i32, i32) {
    %c0_i32 = arith.constant 0 : i32
    %c0_i32_0 = arith.constant 0 : i32
    %c0_i32_1 = arith.constant 0 : i32
    return %c0_i32, %c0_i32_0 : i32, i32
  }
  func.func @transform_4(%arg0: i32) -> (i32, i32) {
    %c0_i32 = arith.constant 0 : i32
    %c0_i32_0 = arith.constant 0 : i32
    %c0_i32_1 = arith.constant 0 : i32
    return %c0_i32, %c0_i32_0 : i32, i32
  }
  func.func @transform_5(%arg0: i32) -> (i32, i32) {
    %c0_i32 = arith.constant 0 : i32
    %c0_i32_0 = arith.constant 0 : i32
    %c0_i32_1 = arith.constant 0 : i32
    return %c0_i32, %c0_i32_0 : i32, i32
  }
  func.func @transform_6(%arg0: i32) -> (i32, i32) {
    %c0_i32 = arith.constant 0 : i32
    %c0_i32_0 = arith.constant 0 : i32
    %c0_i32_1 = arith.constant 0 : i32
    return %c0_i32, %c0_i32_0 : i32, i32
  }
  func.func @transform_7(%arg0: i32) -> (i32, i32) {
    %c0_i32 = arith.constant 0 : i32
    %c0_i32_0 = arith.constant 0 : i32
    %c0_i32_1 = arith.constant 0 : i32
    return %c0_i32, %c0_i32_0 : i32, i32
  }
  func.func @transform_8(%arg0: i32) -> (i32, i32) {
    %c0_i32 = arith.constant 0 : i32
    %c0_i32_0 = arith.constant 0 : i32
    %c0_i32_1 = arith.constant 0 : i32
    return %c0_i32, %c0_i32_0 : i32, i32
  }
  func.func @transform_9(%arg0: i32) -> (i32, i32) {
    %c0_i32 = arith.constant 0 : i32
    %c0_i32_0 = arith.constant 0 : i32
    %c0_i32_1 = arith.constant 0 : i32
    return %c0_i32, %c0_i32_0 : i32, i32
  }
  func.func @transform_10(%arg0: i32) -> (i32, i32) {
    %c0_i32 = arith.constant 0 : i32
    %c0_i32_0 = arith.constant 0 : i32
    %c0_i32_1 = arith.constant 0 : i32
    return %c0_i32, %c0_i32_0 : i32, i32
  }
  func.func @transform_11(%arg0: i32) -> (i32, i32) {
    %c0_i32 = arith.constant 0 : i32
    %c0_i32_0 = arith.constant 0 : i32
    return %arg0, %c0_i32 : i32, i32
  }
}

</mosaic_0001>

<llo_original>
// kernel: image_state_projector_forward.1
$region0: #{image_state_projector_forward.1}
  #allocation0 [shape = 'u32[]', space=smem, size = 0x4, offset = 0x4, fixed_abs, tag = 'smem constant byte address 0x4 - core index']
  #allocation1 [shape = 'u32[144,128]{1,0:T(1,128)}', space=vmem, size = 0x12000, scoped, tag = 'internal scratch']
  %s0 = inlined_call_operand.vmem [shape: f32[2,1024], index: 0, kind: input, shape index: {}]
  %s1 = inlined_call_operand.vmem [shape: f32[2,32], index: 1, kind: input, shape index: {}]
  %s2 = inlined_call_operand.hbm [shape: bf16[1024,512], index: 2, kind: input, shape index: {}]
  %s3 = inlined_call_operand.vmem [shape: f32[1,512], index: 3, kind: input, shape index: {}]
  %s4 = inlined_call_operand.hbm [shape: bf16[512,256], index: 4, kind: input, shape index: {}]
  %s5 = inlined_call_operand.vmem [shape: f32[1,256], index: 5, kind: input, shape index: {}]
  %s6 = inlined_call_operand.vmem [shape: bf16[256,32], index: 6, kind: input, shape index: {}]
  %s7 = inlined_call_operand.vmem [shape: f32[1,32], index: 7, kind: input, shape index: {}]
  %s8 = inlined_call_operand.vmem [shape: bf16[32,33], index: 8, kind: input, shape index: {}]
  %s9 = inlined_call_operand.vmem [shape: bf16[32,33], index: 9, kind: input, shape index: {}]
  %s10 = inlined_call_operand.vmem [shape: f32[1,33], index: 10, kind: input, shape index: {}]
  %s11 = inlined_call_operand.hbm [shape: f32[2,33], index: 11, kind: output, shape index: {}]
  %s12 = sld [smem:[#allocation0]]
  $region62: #{image_state_projector_forward.1} parent=0
    _
  %s14 = ssub.s32 1, %s12
  %s15 = scalar_select 0, %s14, %s12
  $region1: #{image_state_projector_forward.1} parent=0
    #allocation2 [shape = 'u8[1048576]{0}', space=vmem, size = 0x100000, scoped, tag = 'input window, operand 2, single buffered']
    #allocation3 [shape = 's32[1]{0}', space=sflag, size = 0x4, scoped, tag = 'scoped memory for image_state_projector_forward.1']
    #allocation4 [shape = 's32[1]{0}', space=sflag, size = 0x4, scoped, tag = 'scoped memory for image_state_projector_forward.1']
    #allocation5 [shape = 'u8[262144]{0}', space=vmem, size = 0x40000, scoped, tag = 'input window, operand 4, single buffered']
    #allocation6 [shape = 's32[1]{0}', space=sflag, size = 0x4, scoped, tag = 'scoped memory for image_state_projector_forward.1']
    #allocation7 [shape = 'u8[1024]{0}', space=vmem, size = 0x400, scoped, tag = 'output window, operand 0, single buffered']
    %16 = vsyncpa [#allocation3], 0
    %17 = vsyncpa [#allocation6], 0
    %18 = vsyncpa [#allocation4], 0
    // Predicated region
    $region2: #{image_state_projector_forward.1} parent=1 // pred_check
      _
    $region3: #{image_state_projector_forward.1} parent=1 // pred_check_branch
      %20 = sbr.rel (0) target = $region5
    $region4: #{image_state_projector_forward.1} parent=1 // pred_region
      _
    $region5: #{image_state_projector_forward.1} parent=1 // pred_fallthru
      _
    // Predicated region
    $region6: #{image_state_projector_forward.1} parent=1 // pred_check
      _
    $region7: #{image_state_projector_forward.1} parent=1 // pred_check_branch
      %22 = sbr.rel (0) target = $region9
    $region8: #{image_state_projector_forward.1} parent=1 // pred_region
      _
    $region9: #{image_state_projector_forward.1} parent=1 // pred_fallthru
      _
    // Predicated region
    $region10: #{image_state_projector_forward.1} parent=1 // pred_check
      _
    $region11: #{image_state_projector_forward.1} parent=1 // pred_check_branch
      %24 = sbr.rel (0) target = $region13
    $region12: #{image_state_projector_forward.1} parent=1 // pred_region
      %s26 = ssub.s32 32768, 32768
      %27 = vsyncadd [#allocation3], %s26
      %s28 = sshll.u32 [#allocation2], 4
      %s29 = int_to_ptr.vmem [resolvable:$true] %s28
      %34 = dma.hbm_to_vmem [thread:$0]  %s2, 32768, %s29, [#allocation3], 256, 256, 16
    $region13: #{image_state_projector_forward.1} parent=1 // pred_fallthru
      _
    // Predicated region
    $region14: #{image_state_projector_forward.1} parent=1 // pred_check
      _
    $region15: #{image_state_projector_forward.1} parent=1 // pred_check_branch
      %36 = sbr.rel (0) target = $region17
    $region16: #{image_state_projector_forward.1} parent=1 // pred_region
      _
    $region17: #{image_state_projector_forward.1} parent=1 // pred_fallthru
      _
    // Predicated region
    $region18: #{image_state_projector_forward.1} parent=1 // pred_check
      _
    $region19: #{image_state_projector_forward.1} parent=1 // pred_check_branch
      %38 = sbr.rel (0) target = $region21
    $region20: #{image_state_projector_forward.1} parent=1 // pred_region
      %s40 = ssub.s32 8192, 8192
      %41 = vsyncadd [#allocation6], %s40
      %s42 = sshll.u32 [#allocation5], 4
      %s43 = int_to_ptr.vmem [resolvable:$true] %s42
      %48 = dma.hbm_to_vmem [thread:$0]  %s4, 8192, %s43, [#allocation6], 128, 128, 8
    $region21: #{image_state_projector_forward.1} parent=1 // pred_fallthru
      _
    // Predicated region
    $region22: #{image_state_projector_forward.1} parent=1 // pred_check
      _
    $region23: #{image_state_projector_forward.1} parent=1 // pred_check_branch
      %50 = sbr.rel (0) target = $region25
    $region24: #{image_state_projector_forward.1} parent=1 // pred_region
      _
    $region25: #{image_state_projector_forward.1} parent=1 // pred_fallthru
      _
    // Predicated region
    $region26: #{image_state_projector_forward.1} parent=1 // pred_check
      _
    $region27: #{image_state_projector_forward.1} parent=1 // pred_check_branch
      %52 = sbr.rel (0) target = $region29
    $region28: #{image_state_projector_forward.1} parent=1 // pred_region
      _
    $region29: #{image_state_projector_forward.1} parent=1 // pred_fallthru
      _
    // Predicated region
    $region30: #{image_state_projector_forward.1} parent=1 // pred_check
      _
    $region31: #{image_state_projector_forward.1} parent=1 // pred_check_branch
      %54 = sbr.rel (0) target = $region33
    $region32: #{image_state_projector_forward.1} parent=1 // pred_region
      _
    $region33: #{image_state_projector_forward.1} parent=1 // pred_fallthru
      _
    // Predicated region
    $region34: #{image_state_projector_forward.1} parent=1 // pred_check
      _
    $region35: #{image_state_projector_forward.1} parent=1 // pred_check_branch
      %56 = sbr.rel (0) target = $region37
    $region36: #{image_state_projector_forward.1} parent=1 // pred_region
      _
    $region37: #{image_state_projector_forward.1} parent=1 // pred_fallthru
      _
    // Predicated region
    $region38: #{image_state_projector_forward.1} parent=1 // pred_check
      _
    $region39: #{image_state_projector_forward.1} parent=1 // pred_check_branch
      %58 = sbr.rel (0) target = $region41
    $region40: #{image_state_projector_forward.1} parent=1 // pred_region
      _
    $region41: #{image_state_projector_forward.1} parent=1 // pred_fallthru
      _
    // Predicated region
    $region42: #{image_state_projector_forward.1} parent=1 // pred_check
      _
    $region43: #{image_state_projector_forward.1} parent=1 // pred_check_branch
      %60 = sbr.rel (0) target = $region45
    $region44: #{image_state_projector_forward.1} parent=1 // pred_region
      _
    $region45: #{image_state_projector_forward.1} parent=1 // pred_fallthru
      _
    // Predicated region
    $region46: #{image_state_projector_forward.1} parent=1 // pred_check
      _
    $region47: #{image_state_projector_forward.1} parent=1 // pred_check_branch
      %62 = sbr.rel (0) target = $region49
    $region48: #{image_state_projector_forward.1} parent=1 // pred_region
      %63 = dma.done [#allocation3], 32768
    $region49: #{image_state_projector_forward.1} parent=1 // pred_fallthru
      _
    // Predicated region
    $region50: #{image_state_projector_forward.1} parent=1 // pred_check
      _
    $region51: #{image_state_projector_forward.1} parent=1 // pred_check_branch
      %65 = sbr.rel (0) target = $region53
    $region52: #{image_state_projector_forward.1} parent=1 // pred_region
      %66 = dma.done [#allocation6], 8192
    $region53: #{image_state_projector_forward.1} parent=1 // pred_fallthru
      _
    %v68 = vld [vmem:[%s0] sm:$0xff]
    %v69 = vld [vmem:[%s0 + $0x8] sm:$0xff]
    %v72 = vcombine.high %v68, %v68
    %v74 = vunpack.c.l.s4 1983009808
    %v75 = vunpack.c.0.s8 %v74
    %v76 = vlaneseq
    %v77 = vshrl.u32 %v76, 7
    %v78 = vsub.s32 %v75, %v77
    %v79 = vrot.slane %v68, %v78
    %v81 = vunpack.c.l.s4 1983009808
    %v82 = vunpack.c.0.s8 %v81
    %v83 = vlaneseq
    %v84 = vshrl.u32 %v83, 7
    %v85 = vsub.s32 %v82, %v84
    %v86 = vrot.slane %v72, %v85
    %v87 = vcombine.high %v79, %v79
    %v88 = vcombine.high %v86, %v86
    %v89 = vcombine.high %v69, %v69
    %v91 = vunpack.c.l.s4 1983009808
    %v92 = vunpack.c.0.s8 %v91
    %v93 = vlaneseq
    %v94 = vshrl.u32 %v93, 7
    %v95 = vsub.s32 %v92, %v94
    %v96 = vrot.slane %v69, %v95
    %v98 = vunpack.c.l.s4 1983009808
    %v99 = vunpack.c.0.s8 %v98
    %v100 = vlaneseq
    %v101 = vshrl.u32 %v100, 7
    %v102 = vsub.s32 %v99, %v101
    %v103 = vrot.slane %v89, %v102
    %v104 = vcombine.high %v96, %v96
    %v105 = vcombine.high %v103, %v103
    %v114 = vpack.c.bf16 %v79, %v79
    %v115 = vpack.c.bf16 %v87, %v87
    %v116 = vpack.c.bf16 %v86, %v86
    %v117 = vpack.c.bf16 %v88, %v88
    %v118 = vpack.c.bf16 %v96, %v96
    %v119 = vpack.c.bf16 %v104, %v104
    %v120 = vpack.c.bf16 %v103, %v103
    %v121 = vpack.c.bf16 %v105, %v105
    %v122 = vld [vmem:[#allocation2] sm:$0xff]
    %v123 = vld [vmem:[#allocation2 + $0x8] sm:$0xff]
    %v124 = vld [vmem:[#allocation2 + $0x10] sm:$0xff]
    %v125 = vld [vmem:[#allocation2 + $0x18] sm:$0xff]
    %v126 = vld [vmem:[#allocation2 + $0x20] sm:$0xff]
    %v127 = vld [vmem:[#allocation2 + $0x28] sm:$0xff]
    %v128 = vld [vmem:[#allocation2 + $0x30] sm:$0xff]
    %v129 = vld [vmem:[#allocation2 + $0x38] sm:$0xff]
    %v130 = vld [vmem:[#allocation2 + $0x40] sm:$0xff]
    %v131 = vld [vmem:[#allocation2 + $0x48] sm:$0xff]
    %v132 = vld [vmem:[#allocation2 + $0x50] sm:$0xff]
    %v133 = vld [vmem:[#allocation2 + $0x58] sm:$0xff]
    %v134 = vld [vmem:[#allocation2 + $0x60] sm:$0xff]
    %v135 = vld [vmem:[#allocation2 + $0x68] sm:$0xff]
    %v136 = vld [vmem:[#allocation2 + $0x70] sm:$0xff]
    %v137 = vld [vmem:[#allocation2 + $0x78] sm:$0xff]
    %v138 = vld [vmem:[#allocation2 + $0x80] sm:$0xff]
    %v139 = vld [vmem:[#allocation2 + $0x88] sm:$0xff]
    %v140 = vld [vmem:[#allocation2 + $0x90] sm:$0xff]
    %v141 = vld [vmem:[#allocation2 + $0x98] sm:$0xff]
    %v142 = vld [vmem:[#allocation2 + $0xa0] sm:$0xff]
    %v143 = vld [vmem:[#allocation2 + $0xa8] sm:$0xff]
    %v144 = vld [vmem:[#allocation2 + $0xb0] sm:$0xff]
    %v145 = vld [vmem:[#allocation2 + $0xb8] sm:$0xff]
    %v146 = vld [vmem:[#allocation2 + $0xc0] sm:$0xff]
    %v147 = vld [vmem:[#allocation2 + $0xc8] sm:$0xff]
    %v148 = vld [vmem:[#allocation2 + $0xd0] sm:$0xff]
    %v149 = vld [vmem:[#allocation2 + $0xd8] sm:$0xff]
    %v150 = vld [vmem:[#allocation2 + $0xe0] sm:$0xff]
    %v151 = vld [vmem:[#allocation2 + $0xe8] sm:$0xff]
    %v152 = vld [vmem:[#allocation2 + $0xf0] sm:$0xff]
    %v153 = vld [vmem:[#allocation2 + $0xf8] sm:$0xff]
    %v154 = vld [vmem:[#allocation2 + $0x100] sm:$0xff]
    %v155 = vld [vmem:[#allocation2 + $0x108] sm:$0xff]
    %v156 = vld [vmem:[#allocation2 + $0x110] sm:$0xff]
    %v157 = vld [vmem:[#allocation2 + $0x118] sm:$0xff]
    %v158 = vld [vmem:[#allocation2 + $0x120] sm:$0xff]
    %v159 = vld [vmem:[#allocation2 + $0x128] sm:$0xff]
    %v160 = vld [vmem:[#allocation2 + $0x130] sm:$0xff]
    %v161 = vld [vmem:[#allocation2 + $0x138] sm:$0xff]
    %v162 = vld [vmem:[#allocation2 + $0x140] sm:$0xff]
    %v163 = vld [vmem:[#allocation2 + $0x148] sm:$0xff]
    %v164 = vld [vmem:[#allocation2 + $0x150] sm:$0xff]
    %v165 = vld [vmem:[#allocation2 + $0x158] sm:$0xff]
    %v166 = vld [vmem:[#allocation2 + $0x160] sm:$0xff]
    %v167 = vld [vmem:[#allocation2 + $0x168] sm:$0xff]
    %v168 = vld [vmem:[#allocation2 + $0x170] sm:$0xff]
    %v169 = vld [vmem:[#allocation2 + $0x178] sm:$0xff]
    %v170 = vld [vmem:[#allocation2 + $0x180] sm:$0xff]
    %v171 = vld [vmem:[#allocation2 + $0x188] sm:$0xff]
    %v172 = vld [vmem:[#allocation2 + $0x190] sm:$0xff]
    %v173 = vld [vmem:[#allocation2 + $0x198] sm:$0xff]
    %v174 = vld [vmem:[#allocation2 + $0x1a0] sm:$0xff]
    %v175 = vld [vmem:[#allocation2 + $0x1a8] sm:$0xff]
    %v176 = vld [vmem:[#allocation2 + $0x1b0] sm:$0xff]
    %v177 = vld [vmem:[#allocation2 + $0x1b8] sm:$0xff]
    %v178 = vld [vmem:[#allocation2 + $0x1c0] sm:$0xff]
    %v179 = vld [vmem:[#allocation2 + $0x1c8] sm:$0xff]
    %v180 = vld [vmem:[#allocation2 + $0x1d0] sm:$0xff]
    %v181 = vld [vmem:[#allocation2 + $0x1d8] sm:$0xff]
    %v182 = vld [vmem:[#allocation2 + $0x1e0] sm:$0xff]
    %v183 = vld [vmem:[#allocation2 + $0x1e8] sm:$0xff]
    %v184 = vld [vmem:[#allocation2 + $0x1f0] sm:$0xff]
    %v185 = vld [vmem:[#allocation2 + $0x1f8] sm:$0xff]
    %v186 = vld [vmem:[#allocation2 + $0x200] sm:$0xff]
    %v187 = vld [vmem:[#allocation2 + $0x208] sm:$0xff]
    %v188 = vld [vmem:[#allocation2 + $0x210] sm:$0xff]
    %v189 = vld [vmem:[#allocation2 + $0x218] sm:$0xff]
    %v190 = vld [vmem:[#allocation2 + $0x220] sm:$0xff]
    %v191 = vld [vmem:[#allocation2 + $0x228] sm:$0xff]
    %v192 = vld [vmem:[#allocation2 + $0x230] sm:$0xff]
    %v193 = vld [vmem:[#allocation2 + $0x238] sm:$0xff]
    %v194 = vld [vmem:[#allocation2 + $0x240] sm:$0xff]
    %v195 = vld [vmem:[#allocation2 + $0x248] sm:$0xff]
    %v196 = vld [vmem:[#allocation2 + $0x250] sm:$0xff]
    %v197 = vld [vmem:[#allocation2 + $0x258] sm:$0xff]
    %v198 = vld [vmem:[#allocation2 + $0x260] sm:$0xff]
    %v199 = vld [vmem:[#allocation2 + $0x268] sm:$0xff]
    %v200 = vld [vmem:[#allocation2 + $0x270] sm:$0xff]
    %v201 = vld [vmem:[#allocation2 + $0x278] sm:$0xff]
    %v202 = vld [vmem:[#allocation2 + $0x280] sm:$0xff]
    %v203 = vld [vmem:[#allocation2 + $0x288] sm:$0xff]
    %v204 = vld [vmem:[#allocation2 + $0x290] sm:$0xff]
    %v205 = vld [vmem:[#allocation2 + $0x298] sm:$0xff]
    %v206 = vld [vmem:[#allocation2 + $0x2a0] sm:$0xff]
    %v207 = vld [vmem:[#allocation2 + $0x2a8] sm:$0xff]
    %v208 = vld [vmem:[#allocation2 + $0x2b0] sm:$0xff]
    %v209 = vld [vmem:[#allocation2 + $0x2b8] sm:$0xff]
    %v210 = vld [vmem:[#allocation2 + $0x2c0] sm:$0xff]
    %v211 = vld [vmem:[#allocation2 + $0x2c8] sm:$0xff]
    %v212 = vld [vmem:[#allocation2 + $0x2d0] sm:$0xff]
    %v213 = vld [vmem:[#allocation2 + $0x2d8] sm:$0xff]
    %v214 = vld [vmem:[#allocation2 + $0x2e0] sm:$0xff]
    %v215 = vld [vmem:[#allocation2 + $0x2e8] sm:$0xff]
    %v216 = vld [vmem:[#allocation2 + $0x2f0] sm:$0xff]
    %v217 = vld [vmem:[#allocation2 + $0x2f8] sm:$0xff]
    %v218 = vld [vmem:[#allocation2 + $0x300] sm:$0xff]
    %v219 = vld [vmem:[#allocation2 + $0x308] sm:$0xff]
    %v220 = vld [vmem:[#allocation2 + $0x310] sm:$0xff]
    %v221 = vld [vmem:[#allocation2 + $0x318] sm:$0xff]
    %v222 = vld [vmem:[#allocation2 + $0x320] sm:$0xff]
    %v223 = vld [vmem:[#allocation2 + $0x328] sm:$0xff]
    %v224 = vld [vmem:[#allocation2 + $0x330] sm:$0xff]
    %v225 = vld [vmem:[#allocation2 + $0x338] sm:$0xff]
    %v226 = vld [vmem:[#allocation2 + $0x340] sm:$0xff]
    %v227 = vld [vmem:[#allocation2 + $0x348] sm:$0xff]
    %v228 = vld [vmem:[#allocation2 + $0x350] sm:$0xff]
    %v229 = vld [vmem:[#allocation2 + $0x358] sm:$0xff]
    %v230 = vld [vmem:[#allocation2 + $0x360] sm:$0xff]
    %v231 = vld [vmem:[#allocation2 + $0x368] sm:$0xff]
    %v232 = vld [vmem:[#allocation2 + $0x370] sm:$0xff]
    %v233 = vld [vmem:[#allocation2 + $0x378] sm:$0xff]
    %v234 = vld [vmem:[#allocation2 + $0x380] sm:$0xff]
    %v235 = vld [vmem:[#allocation2 + $0x388] sm:$0xff]
    %v236 = vld [vmem:[#allocation2 + $0x390] sm:$0xff]
    %v237 = vld [vmem:[#allocation2 + $0x398] sm:$0xff]
    %v238 = vld [vmem:[#allocation2 + $0x3a0] sm:$0xff]
    %v239 = vld [vmem:[#allocation2 + $0x3a8] sm:$0xff]
    %v240 = vld [vmem:[#allocation2 + $0x3b0] sm:$0xff]
    %v241 = vld [vmem:[#allocation2 + $0x3b8] sm:$0xff]
    %v242 = vld [vmem:[#allocation2 + $0x3c0] sm:$0xff]
    %v243 = vld [vmem:[#allocation2 + $0x3c8] sm:$0xff]
    %v244 = vld [vmem:[#allocation2 + $0x3d0] sm:$0xff]
    %v245 = vld [vmem:[#allocation2 + $0x3d8] sm:$0xff]
    %v246 = vld [vmem:[#allocation2 + $0x3e0] sm:$0xff]
    %v247 = vld [vmem:[#allocation2 + $0x3e8] sm:$0xff]
    %v248 = vld [vmem:[#allocation2 + $0x3f0] sm:$0xff]
    %v249 = vld [vmem:[#allocation2 + $0x3f8] sm:$0xff]
    %v250 = vld [vmem:[#allocation2 + $0x400] sm:$0xff]
    %v251 = vld [vmem:[#allocation2 + $0x408] sm:$0xff]
    %v252 = vld [vmem:[#allocation2 + $0x410] sm:$0xff]
    %v253 = vld [vmem:[#allocation2 + $0x418] sm:$0xff]
    %v254 = vld [vmem:[#allocation2 + $0x420] sm:$0xff]
    %v255 = vld [vmem:[#allocation2 + $0x428] sm:$0xff]
    %v256 = vld [vmem:[#allocation2 + $0x430] sm:$0xff]
    %v257 = vld [vmem:[#allocation2 + $0x438] sm:$0xff]
    %v258 = vld [vmem:[#allocation2 + $0x440] sm:$0xff]
    %v259 = vld [vmem:[#allocation2 + $0x448] sm:$0xff]
    %v260 = vld [vmem:[#allocation2 + $0x450] sm:$0xff]
    %v261 = vld [vmem:[#allocation2 + $0x458] sm:$0xff]
    %v262 = vld [vmem:[#allocation2 + $0x460] sm:$0xff]
    %v263 = vld [vmem:[#allocation2 + $0x468] sm:$0xff]
    %v264 = vld [vmem:[#allocation2 + $0x470] sm:$0xff]
    %v265 = vld [vmem:[#allocation2 + $0x478] sm:$0xff]
    %v266 = vld [vmem:[#allocation2 + $0x480] sm:$0xff]
    %v267 = vld [vmem:[#allocation2 + $0x488] sm:$0xff]
    %v268 = vld [vmem:[#allocation2 + $0x490] sm:$0xff]
    %v269 = vld [vmem:[#allocation2 + $0x498] sm:$0xff]
    %v270 = vld [vmem:[#allocation2 + $0x4a0] sm:$0xff]
    %v271 = vld [vmem:[#allocation2 + $0x4a8] sm:$0xff]
    %v272 = vld [vmem:[#allocation2 + $0x4b0] sm:$0xff]
    %v273 = vld [vmem:[#allocation2 + $0x4b8] sm:$0xff]
    %v274 = vld [vmem:[#allocation2 + $0x4c0] sm:$0xff]
    %v275 = vld [vmem:[#allocation2 + $0x4c8] sm:$0xff]
    %v276 = vld [vmem:[#allocation2 + $0x4d0] sm:$0xff]
    %v277 = vld [vmem:[#allocation2 + $0x4d8] sm:$0xff]
    %v278 = vld [vmem:[#allocation2 + $0x4e0] sm:$0xff]
    %v279 = vld [vmem:[#allocation2 + $0x4e8] sm:$0xff]
    %v280 = vld [vmem:[#allocation2 + $0x4f0] sm:$0xff]
    %v281 = vld [vmem:[#allocation2 + $0x4f8] sm:$0xff]
    %v282 = vld [vmem:[#allocation2 + $0x500] sm:$0xff]
    %v283 = vld [vmem:[#allocation2 + $0x508] sm:$0xff]
    %v284 = vld [vmem:[#allocation2 + $0x510] sm:$0xff]
    %v285 = vld [vmem:[#allocation2 + $0x518] sm:$0xff]
    %v286 = vld [vmem:[#allocation2 + $0x520] sm:$0xff]
    %v287 = vld [vmem:[#allocation2 + $0x528] sm:$0xff]
    %v288 = vld [vmem:[#allocation2 + $0x530] sm:$0xff]
    %v289 = vld [vmem:[#allocation2 + $0x538] sm:$0xff]
    %v290 = vld [vmem:[#allocation2 + $0x540] sm:$0xff]
    %v291 = vld [vmem:[#allocation2 + $0x548] sm:$0xff]
    %v292 = vld [vmem:[#allocation2 + $0x550] sm:$0xff]
    %v293 = vld [vmem:[#allocation2 + $0x558] sm:$0xff]
    %v294 = vld [vmem:[#allocation2 + $0x560] sm:$0xff]
    %v295 = vld [vmem:[#allocation2 + $0x568] sm:$0xff]
    %v296 = vld [vmem:[#allocation2 + $0x570] sm:$0xff]
    %v297 = vld [vmem:[#allocation2 + $0x578] sm:$0xff]
    %v298 = vld [vmem:[#allocation2 + $0x580] sm:$0xff]
    %v299 = vld [vmem:[#allocation2 + $0x588] sm:$0xff]
    %v300 = vld [vmem:[#allocation2 + $0x590] sm:$0xff]
    %v301 = vld [vmem:[#allocation2 + $0x598] sm:$0xff]
    %v302 = vld [vmem:[#allocation2 + $0x5a0] sm:$0xff]
    %v303 = vld [vmem:[#allocation2 + $0x5a8] sm:$0xff]
    %v304 = vld [vmem:[#allocation2 + $0x5b0] sm:$0xff]
    %v305 = vld [vmem:[#allocation2 + $0x5b8] sm:$0xff]
    %v306 = vld [vmem:[#allocation2 + $0x5c0] sm:$0xff]
    %v307 = vld [vmem:[#allocation2 + $0x5c8] sm:$0xff]
    %v308 = vld [vmem:[#allocation2 + $0x5d0] sm:$0xff]
    %v309 = vld [vmem:[#allocation2 + $0x5d8] sm:$0xff]
    %v310 = vld [vmem:[#allocation2 + $0x5e0] sm:$0xff]
    %v311 = vld [vmem:[#allocation2 + $0x5e8] sm:$0xff]
    %v312 = vld [vmem:[#allocation2 + $0x5f0] sm:$0xff]
    %v313 = vld [vmem:[#allocation2 + $0x5f8] sm:$0xff]
    %v314 = vld [vmem:[#allocation2 + $0x600] sm:$0xff]
    %v315 = vld [vmem:[#allocation2 + $0x608] sm:$0xff]
    %v316 = vld [vmem:[#allocation2 + $0x610] sm:$0xff]
    %v317 = vld [vmem:[#allocation2 + $0x618] sm:$0xff]
    %v318 = vld [vmem:[#allocation2 + $0x620] sm:$0xff]
    %v319 = vld [vmem:[#allocation2 + $0x628] sm:$0xff]
    %v320 = vld [vmem:[#allocation2 + $0x630] sm:$0xff]
    %v321 = vld [vmem:[#allocation2 + $0x638] sm:$0xff]
    %v322 = vld [vmem:[#allocation2 + $0x640] sm:$0xff]
    %v323 = vld [vmem:[#allocation2 + $0x648] sm:$0xff]
    %v324 = vld [vmem:[#allocation2 + $0x650] sm:$0xff]
    %v325 = vld [vmem:[#allocation2 + $0x658] sm:$0xff]
    %v326 = vld [vmem:[#allocation2 + $0x660] sm:$0xff]
    %v327 = vld [vmem:[#allocation2 + $0x668] sm:$0xff]
    %v328 = vld [vmem:[#allocation2 + $0x670] sm:$0xff]
    %v329 = vld [vmem:[#allocation2 + $0x678] sm:$0xff]
    %v330 = vld [vmem:[#allocation2 + $0x680] sm:$0xff]
    %v331 = vld [vmem:[#allocation2 + $0x688] sm:$0xff]
    %v332 = vld [vmem:[#allocation2 + $0x690] sm:$0xff]
    %v333 = vld [vmem:[#allocation2 + $0x698] sm:$0xff]
    %v334 = vld [vmem:[#allocation2 + $0x6a0] sm:$0xff]
    %v335 = vld [vmem:[#allocation2 + $0x6a8] sm:$0xff]
    %v336 = vld [vmem:[#allocation2 + $0x6b0] sm:$0xff]
    %v337 = vld [vmem:[#allocation2 + $0x6b8] sm:$0xff]
    %v338 = vld [vmem:[#allocation2 + $0x6c0] sm:$0xff]
    %v339 = vld [vmem:[#allocation2 + $0x6c8] sm:$0xff]
    %v340 = vld [vmem:[#allocation2 + $0x6d0] sm:$0xff]
    %v341 = vld [vmem:[#allocation2 + $0x6d8] sm:$0xff]
    %v342 = vld [vmem:[#allocation2 + $0x6e0] sm:$0xff]
    %v343 = vld [vmem:[#allocation2 + $0x6e8] sm:$0xff]
    %v344 = vld [vmem:[#allocation2 + $0x6f0] sm:$0xff]
    %v345 = vld [vmem:[#allocation2 + $0x6f8] sm:$0xff]
    %v346 = vld [vmem:[#allocation2 + $0x700] sm:$0xff]
    %v347 = vld [vmem:[#allocation2 + $0x708] sm:$0xff]
    %v348 = vld [vmem:[#allocation2 + $0x710] sm:$0xff]
    %v349 = vld [vmem:[#allocation2 + $0x718] sm:$0xff]
    %v350 = vld [vmem:[#allocation2 + $0x720] sm:$0xff]
    %v351 = vld [vmem:[#allocation2 + $0x728] sm:$0xff]
    %v352 = vld [vmem:[#allocation2 + $0x730] sm:$0xff]
    %v353 = vld [vmem:[#allocation2 + $0x738] sm:$0xff]
    %v354 = vld [vmem:[#allocation2 + $0x740] sm:$0xff]
    %v355 = vld [vmem:[#allocation2 + $0x748] sm:$0xff]
    %v356 = vld [vmem:[#allocation2 + $0x750] sm:$0xff]
    %v357 = vld [vmem:[#allocation2 + $0x758] sm:$0xff]
    %v358 = vld [vmem:[#allocation2 + $0x760] sm:$0xff]
    %v359 = vld [vmem:[#allocation2 + $0x768] sm:$0xff]
    %v360 = vld [vmem:[#allocation2 + $0x770] sm:$0xff]
    %v361 = vld [vmem:[#allocation2 + $0x778] sm:$0xff]
    %v362 = vld [vmem:[#allocation2 + $0x780] sm:$0xff]
    %v363 = vld [vmem:[#allocation2 + $0x788] sm:$0xff]
    %v364 = vld [vmem:[#allocation2 + $0x790] sm:$0xff]
    %v365 = vld [vmem:[#allocation2 + $0x798] sm:$0xff]
    %v366 = vld [vmem:[#allocation2 + $0x7a0] sm:$0xff]
    %v367 = vld [vmem:[#allocation2 + $0x7a8] sm:$0xff]
    %v368 = vld [vmem:[#allocation2 + $0x7b0] sm:$0xff]
    %v369 = vld [vmem:[#allocation2 + $0x7b8] sm:$0xff]
    %v370 = vld [vmem:[#allocation2 + $0x7c0] sm:$0xff]
    %v371 = vld [vmem:[#allocation2 + $0x7c8] sm:$0xff]
    %v372 = vld [vmem:[#allocation2 + $0x7d0] sm:$0xff]
    %v373 = vld [vmem:[#allocation2 + $0x7d8] sm:$0xff]
    %v374 = vld [vmem:[#allocation2 + $0x7e0] sm:$0xff]
    %v375 = vld [vmem:[#allocation2 + $0x7e8] sm:$0xff]
    %v376 = vld [vmem:[#allocation2 + $0x7f0] sm:$0xff]
    %v377 = vld [vmem:[#allocation2 + $0x7f8] sm:$0xff]
    %v378 = vld [vmem:[%s3] sm:$0xf]
    %v380 = vlaneseq
    %v381 = vshrl.u32 %v380, 7
    %v382 = vsub.s32 0, %v381
    %v383 = vrot.slane %v378, %v382
    %v384 = vlaneseq
    %v385 = vshrl.u32 %v384, 7
    %v386 = vsub.s32 1, %v385
    %v387 = vrot.slane %v378, %v386
    %v388 = vlaneseq
    %v389 = vshrl.u32 %v388, 7
    %v390 = vsub.s32 2, %v389
    %v391 = vrot.slane %v378, %v390
    %v392 = vlaneseq
    %v393 = vshrl.u32 %v392, 7
    %v394 = vsub.s32 3, %v393
    %v395 = vrot.slane %v378, %v394
    %v656 = vunpack.c.l.b16 %v122
    %v657 = vunpack.c.h.b16 %v122
    %v658 = vunpack.c.l.b16 %v123
    %v659 = vunpack.c.h.b16 %v123
    %v660 = vunpack.c.l.b16 %v124
    %v661 = vunpack.c.h.b16 %v124
    %v662 = vunpack.c.l.b16 %v125
    %v663 = vunpack.c.h.b16 %v125
    %v664 = vunpack.c.l.b16 %v126
    %v665 = vunpack.c.h.b16 %v126
    %v666 = vunpack.c.l.b16 %v127
    %v667 = vunpack.c.h.b16 %v127
    %v668 = vunpack.c.l.b16 %v128
    %v669 = vunpack.c.h.b16 %v128
    %v670 = vunpack.c.l.b16 %v129
    %v671 = vunpack.c.h.b16 %v129
    %v672 = vunpack.c.l.b16 %v130
    %v673 = vunpack.c.h.b16 %v130
    %v674 = vunpack.c.l.b16 %v131
    %v675 = vunpack.c.h.b16 %v131
    %v676 = vunpack.c.l.b16 %v132
    %v677 = vunpack.c.h.b16 %v132
    %v678 = vunpack.c.l.b16 %v133
    %v679 = vunpack.c.h.b16 %v133
    %v680 = vunpack.c.l.b16 %v134
    %v681 = vunpack.c.h.b16 %v134
    %v682 = vunpack.c.l.b16 %v135
    %v683 = vunpack.c.h.b16 %v135
    %v684 = vunpack.c.l.b16 %v136
    %v685 = vunpack.c.h.b16 %v136
    %v686 = vunpack.c.l.b16 %v137
    %v687 = vunpack.c.h.b16 %v137
    %v688 = vunpack.c.l.b16 %v138
    %v689 = vunpack.c.h.b16 %v138
    %v690 = vunpack.c.l.b16 %v139
    %v691 = vunpack.c.h.b16 %v139
    %v692 = vunpack.c.l.b16 %v140
    %v693 = vunpack.c.h.b16 %v140
    %v694 = vunpack.c.l.b16 %v141
    %v695 = vunpack.c.h.b16 %v141
    %v696 = vunpack.c.l.b16 %v142
    %v697 = vunpack.c.h.b16 %v142
    %v698 = vunpack.c.l.b16 %v143
    %v699 = vunpack.c.h.b16 %v143
    %v700 = vunpack.c.l.b16 %v144
    %v701 = vunpack.c.h.b16 %v144
    %v702 = vunpack.c.l.b16 %v145
    %v703 = vunpack.c.h.b16 %v145
    %v704 = vunpack.c.l.b16 %v146
    %v705 = vunpack.c.h.b16 %v146
    %v706 = vunpack.c.l.b16 %v147
    %v707 = vunpack.c.h.b16 %v147
    %v708 = vunpack.c.l.b16 %v148
    %v709 = vunpack.c.h.b16 %v148
    %v710 = vunpack.c.l.b16 %v149
    %v711 = vunpack.c.h.b16 %v149
    %v712 = vunpack.c.l.b16 %v150
    %v713 = vunpack.c.h.b16 %v150
    %v714 = vunpack.c.l.b16 %v151
    %v715 = vunpack.c.h.b16 %v151
    %v716 = vunpack.c.l.b16 %v152
    %v717 = vunpack.c.h.b16 %v152
    %v718 = vunpack.c.l.b16 %v153
    %v719 = vunpack.c.h.b16 %v153
    %v720 = vunpack.c.l.b16 %v154
    %v721 = vunpack.c.h.b16 %v154
    %v722 = vunpack.c.l.b16 %v155
    %v723 = vunpack.c.h.b16 %v155
    %v724 = vunpack.c.l.b16 %v156
    %v725 = vunpack.c.h.b16 %v156
    %v726 = vunpack.c.l.b16 %v157
    %v727 = vunpack.c.h.b16 %v157
    %v728 = vunpack.c.l.b16 %v158
    %v729 = vunpack.c.h.b16 %v158
    %v730 = vunpack.c.l.b16 %v159
    %v731 = vunpack.c.h.b16 %v159
    %v732 = vunpack.c.l.b16 %v160
    %v733 = vunpack.c.h.b16 %v160
    %v734 = vunpack.c.l.b16 %v161
    %v735 = vunpack.c.h.b16 %v161
    %v736 = vunpack.c.l.b16 %v162
    %v737 = vunpack.c.h.b16 %v162
    %v738 = vunpack.c.l.b16 %v163
    %v739 = vunpack.c.h.b16 %v163
    %v740 = vunpack.c.l.b16 %v164
    %v741 = vunpack.c.h.b16 %v164
    %v742 = vunpack.c.l.b16 %v165
    %v743 = vunpack.c.h.b16 %v165
    %v744 = vunpack.c.l.b16 %v166
    %v745 = vunpack.c.h.b16 %v166
    %v746 = vunpack.c.l.b16 %v167
    %v747 = vunpack.c.h.b16 %v167
    %v748 = vunpack.c.l.b16 %v168
    %v749 = vunpack.c.h.b16 %v168
    %v750 = vunpack.c.l.b16 %v169
    %v751 = vunpack.c.h.b16 %v169
    %v752 = vunpack.c.l.b16 %v170
    %v753 = vunpack.c.h.b16 %v170
    %v754 = vunpack.c.l.b16 %v171
    %v755 = vunpack.c.h.b16 %v171
    %v756 = vunpack.c.l.b16 %v172
    %v757 = vunpack.c.h.b16 %v172
    %v758 = vunpack.c.l.b16 %v173
    %v759 = vunpack.c.h.b16 %v173
    %v760 = vunpack.c.l.b16 %v174
    %v761 = vunpack.c.h.b16 %v174
    %v762 = vunpack.c.l.b16 %v175
    %v763 = vunpack.c.h.b16 %v175
    %v764 = vunpack.c.l.b16 %v176
    %v765 = vunpack.c.h.b16 %v176
    %v766 = vunpack.c.l.b16 %v177
    %v767 = vunpack.c.h.b16 %v177
    %v768 = vunpack.c.l.b16 %v178
    %v769 = vunpack.c.h.b16 %v178
    %v770 = vunpack.c.l.b16 %v179
    %v771 = vunpack.c.h.b16 %v179
    %v772 = vunpack.c.l.b16 %v180
    %v773 = vunpack.c.h.b16 %v180
    %v774 = vunpack.c.l.b16 %v181
    %v775 = vunpack.c.h.b16 %v181
    %v776 = vunpack.c.l.b16 %v182
    %v777 = vunpack.c.h.b16 %v182
    %v778 = vunpack.c.l.b16 %v183
    %v779 = vunpack.c.h.b16 %v183
    %v780 = vunpack.c.l.b16 %v184
    %v781 = vunpack.c.h.b16 %v184
    %v782 = vunpack.c.l.b16 %v185
    %v783 = vunpack.c.h.b16 %v185
    %v784 = vunpack.c.l.b16 %v186
    %v785 = vunpack.c.h.b16 %v186
    %v786 = vunpack.c.l.b16 %v187
    %v787 = vunpack.c.h.b16 %v187
    %v788 = vunpack.c.l.b16 %v188
    %v789 = vunpack.c.h.b16 %v188
    %v790 = vunpack.c.l.b16 %v189
    %v791 = vunpack.c.h.b16 %v189
    %v792 = vunpack.c.l.b16 %v190
    %v793 = vunpack.c.h.b16 %v190
    %v794 = vunpack.c.l.b16 %v191
    %v795 = vunpack.c.h.b16 %v191
    %v796 = vunpack.c.l.b16 %v192
    %v797 = vunpack.c.h.b16 %v192
    %v798 = vunpack.c.l.b16 %v193
    %v799 = vunpack.c.h.b16 %v193
    %v800 = vunpack.c.l.b16 %v194
    %v801 = vunpack.c.h.b16 %v194
    %v802 = vunpack.c.l.b16 %v195
    %v803 = vunpack.c.h.b16 %v195
    %v804 = vunpack.c.l.b16 %v196
    %v805 = vunpack.c.h.b16 %v196
    %v806 = vunpack.c.l.b16 %v197
    %v807 = vunpack.c.h.b16 %v197
    %v808 = vunpack.c.l.b16 %v198
    %v809 = vunpack.c.h.b16 %v198
    %v810 = vunpack.c.l.b16 %v199
    %v811 = vunpack.c.h.b16 %v199
    %v812 = vunpack.c.l.b16 %v200
    %v813 = vunpack.c.h.b16 %v200
    %v814 = vunpack.c.l.b16 %v201
    %v815 = vunpack.c.h.b16 %v201
    %v816 = vunpack.c.l.b16 %v202
    %v817 = vunpack.c.h.b16 %v202
    %v818 = vunpack.c.l.b16 %v203
    %v819 = vunpack.c.h.b16 %v203
    %v820 = vunpack.c.l.b16 %v204
    %v821 = vunpack.c.h.b16 %v204
    %v822 = vunpack.c.l.b16 %v205
    %v823 = vunpack.c.h.b16 %v205
    %v824 = vunpack.c.l.b16 %v206
    %v825 = vunpack.c.h.b16 %v206
    %v826 = vunpack.c.l.b16 %v207
    %v827 = vunpack.c.h.b16 %v207
    %v828 = vunpack.c.l.b16 %v208
    %v829 = vunpack.c.h.b16 %v208
    %v830 = vunpack.c.l.b16 %v209
    %v831 = vunpack.c.h.b16 %v209
    %v832 = vunpack.c.l.b16 %v210
    %v833 = vunpack.c.h.b16 %v210
    %v834 = vunpack.c.l.b16 %v211
    %v835 = vunpack.c.h.b16 %v211
    %v836 = vunpack.c.l.b16 %v212
    %v837 = vunpack.c.h.b16 %v212
    %v838 = vunpack.c.l.b16 %v213
    %v839 = vunpack.c.h.b16 %v213
    %v840 = vunpack.c.l.b16 %v214
    %v841 = vunpack.c.h.b16 %v214
    %v842 = vunpack.c.l.b16 %v215
    %v843 = vunpack.c.h.b16 %v215
    %v844 = vunpack.c.l.b16 %v216
    %v845 = vunpack.c.h.b16 %v216
    %v846 = vunpack.c.l.b16 %v217
    %v847 = vunpack.c.h.b16 %v217
    %v848 = vunpack.c.l.b16 %v218
    %v849 = vunpack.c.h.b16 %v218
    %v850 = vunpack.c.l.b16 %v219
    %v851 = vunpack.c.h.b16 %v219
    %v852 = vunpack.c.l.b16 %v220
    %v853 = vunpack.c.h.b16 %v220
    %v854 = vunpack.c.l.b16 %v221
    %v855 = vunpack.c.h.b16 %v221
    %v856 = vunpack.c.l.b16 %v222
    %v857 = vunpack.c.h.b16 %v222
    %v858 = vunpack.c.l.b16 %v223
    %v859 = vunpack.c.h.b16 %v223
    %v860 = vunpack.c.l.b16 %v224
    %v861 = vunpack.c.h.b16 %v224
    %v862 = vunpack.c.l.b16 %v225
    %v863 = vunpack.c.h.b16 %v225
    %v864 = vunpack.c.l.b16 %v226
    %v865 = vunpack.c.h.b16 %v226
    %v866 = vunpack.c.l.b16 %v227
    %v867 = vunpack.c.h.b16 %v227
    %v868 = vunpack.c.l.b16 %v228
    %v869 = vunpack.c.h.b16 %v228
    %v870 = vunpack.c.l.b16 %v229
    %v871 = vunpack.c.h.b16 %v229
    %v872 = vunpack.c.l.b16 %v230
    %v873 = vunpack.c.h.b16 %v230
    %v874 = vunpack.c.l.b16 %v231
    %v875 = vunpack.c.h.b16 %v231
    %v876 = vunpack.c.l.b16 %v232
    %v877 = vunpack.c.h.b16 %v232
    %v878 = vunpack.c.l.b16 %v233
    %v879 = vunpack.c.h.b16 %v233
    %v880 = vunpack.c.l.b16 %v234
    %v881 = vunpack.c.h.b16 %v234
    %v882 = vunpack.c.l.b16 %v235
    %v883 = vunpack.c.h.b16 %v235
    %v884 = vunpack.c.l.b16 %v236
    %v885 = vunpack.c.h.b16 %v236
    %v886 = vunpack.c.l.b16 %v237
    %v887 = vunpack.c.h.b16 %v237
    %v888 = vunpack.c.l.b16 %v238
    %v889 = vunpack.c.h.b16 %v238
    %v890 = vunpack.c.l.b16 %v239
    %v891 = vunpack.c.h.b16 %v239
    %v892 = vunpack.c.l.b16 %v240
    %v893 = vunpack.c.h.b16 %v240
    %v894 = vunpack.c.l.b16 %v241
    %v895 = vunpack.c.h.b16 %v241
    %v896 = vunpack.c.l.b16 %v242
    %v897 = vunpack.c.h.b16 %v242
    %v898 = vunpack.c.l.b16 %v243
    %v899 = vunpack.c.h.b16 %v243
    %v900 = vunpack.c.l.b16 %v244
    %v901 = vunpack.c.h.b16 %v244
    %v902 = vunpack.c.l.b16 %v245
    %v903 = vunpack.c.h.b16 %v245
    %v904 = vunpack.c.l.b16 %v246
    %v905 = vunpack.c.h.b16 %v246
    %v906 = vunpack.c.l.b16 %v247
    %v907 = vunpack.c.h.b16 %v247
    %v908 = vunpack.c.l.b16 %v248
    %v909 = vunpack.c.h.b16 %v248
    %v910 = vunpack.c.l.b16 %v249
    %v911 = vunpack.c.h.b16 %v249
    %v912 = vunpack.c.l.b16 %v250
    %v913 = vunpack.c.h.b16 %v250
    %v914 = vunpack.c.l.b16 %v251
    %v915 = vunpack.c.h.b16 %v251
    %v916 = vunpack.c.l.b16 %v252
    %v917 = vunpack.c.h.b16 %v252
    %v918 = vunpack.c.l.b16 %v253
    %v919 = vunpack.c.h.b16 %v253
    %v920 = vunpack.c.l.b16 %v254
    %v921 = vunpack.c.h.b16 %v254
    %v922 = vunpack.c.l.b16 %v255
    %v923 = vunpack.c.h.b16 %v255
    %v924 = vunpack.c.l.b16 %v256
    %v925 = vunpack.c.h.b16 %v256
    %v926 = vunpack.c.l.b16 %v257
    %v927 = vunpack.c.h.b16 %v257
    %v928 = vunpack.c.l.b16 %v258
    %v929 = vunpack.c.h.b16 %v258
    %v930 = vunpack.c.l.b16 %v259
    %v931 = vunpack.c.h.b16 %v259
    %v932 = vunpack.c.l.b16 %v260
    %v933 = vunpack.c.h.b16 %v260
    %v934 = vunpack.c.l.b16 %v261
    %v935 = vunpack.c.h.b16 %v261
    %v936 = vunpack.c.l.b16 %v262
    %v937 = vunpack.c.h.b16 %v262
    %v938 = vunpack.c.l.b16 %v263
    %v939 = vunpack.c.h.b16 %v263
    %v940 = vunpack.c.l.b16 %v264
    %v941 = vunpack.c.h.b16 %v264
    %v942 = vunpack.c.l.b16 %v265
    %v943 = vunpack.c.h.b16 %v265
    %v944 = vunpack.c.l.b16 %v266
    %v945 = vunpack.c.h.b16 %v266
    %v946 = vunpack.c.l.b16 %v267
    %v947 = vunpack.c.h.b16 %v267
    %v948 = vunpack.c.l.b16 %v268
    %v949 = vunpack.c.h.b16 %v268
    %v950 = vunpack.c.l.b16 %v269
    %v951 = vunpack.c.h.b16 %v269
    %v952 = vunpack.c.l.b16 %v270
    %v953 = vunpack.c.h.b16 %v270
    %v954 = vunpack.c.l.b16 %v271
    %v955 = vunpack.c.h.b16 %v271
    %v956 = vunpack.c.l.b16 %v272
    %v957 = vunpack.c.h.b16 %v272
    %v958 = vunpack.c.l.b16 %v273
    %v959 = vunpack.c.h.b16 %v273
    %v960 = vunpack.c.l.b16 %v274
    %v961 = vunpack.c.h.b16 %v274
    %v962 = vunpack.c.l.b16 %v275
    %v963 = vunpack.c.h.b16 %v275
    %v964 = vunpack.c.l.b16 %v276
    %v965 = vunpack.c.h.b16 %v276
    %v966 = vunpack.c.l.b16 %v277
    %v967 = vunpack.c.h.b16 %v277
    %v968 = vunpack.c.l.b16 %v278
    %v969 = vunpack.c.h.b16 %v278
    %v970 = vunpack.c.l.b16 %v279
    %v971 = vunpack.c.h.b16 %v279
    %v972 = vunpack.c.l.b16 %v280
    %v973 = vunpack.c.h.b16 %v280
    %v974 = vunpack.c.l.b16 %v281
    %v975 = vunpack.c.h.b16 %v281
    %v976 = vunpack.c.l.b16 %v282
    %v977 = vunpack.c.h.b16 %v282
    %v978 = vunpack.c.l.b16 %v283
    %v979 = vunpack.c.h.b16 %v283
    %v980 = vunpack.c.l.b16 %v284
    %v981 = vunpack.c.h.b16 %v284
    %v982 = vunpack.c.l.b16 %v285
    %v983 = vunpack.c.h.b16 %v285
    %v984 = vunpack.c.l.b16 %v286
    %v985 = vunpack.c.h.b16 %v286
    %v986 = vunpack.c.l.b16 %v287
    %v987 = vunpack.c.h.b16 %v287
    %v988 = vunpack.c.l.b16 %v288
    %v989 = vunpack.c.h.b16 %v288
    %v990 = vunpack.c.l.b16 %v289
    %v991 = vunpack.c.h.b16 %v289
    %v992 = vunpack.c.l.b16 %v290
    %v993 = vunpack.c.h.b16 %v290
    %v994 = vunpack.c.l.b16 %v291
    %v995 = vunpack.c.h.b16 %v291
    %v996 = vunpack.c.l.b16 %v292
    %v997 = vunpack.c.h.b16 %v292
    %v998 = vunpack.c.l.b16 %v293
    %v999 = vunpack.c.h.b16 %v293
    %v1000 = vunpack.c.l.b16 %v294
    %v1001 = vunpack.c.h.b16 %v294
    %v1002 = vunpack.c.l.b16 %v295
    %v1003 = vunpack.c.h.b16 %v295
    %v1004 = vunpack.c.l.b16 %v296
    %v1005 = vunpack.c.h.b16 %v296
    %v1006 = vunpack.c.l.b16 %v297
    %v1007 = vunpack.c.h.b16 %v297
    %v1008 = vunpack.c.l.b16 %v298
    %v1009 = vunpack.c.h.b16 %v298
    %v1010 = vunpack.c.l.b16 %v299
    %v1011 = vunpack.c.h.b16 %v299
    %v1012 = vunpack.c.l.b16 %v300
    %v1013 = vunpack.c.h.b16 %v300
    %v1014 = vunpack.c.l.b16 %v301
    %v1015 = vunpack.c.h.b16 %v301
    %v1016 = vunpack.c.l.b16 %v302
    %v1017 = vunpack.c.h.b16 %v302
    %v1018 = vunpack.c.l.b16 %v303
    %v1019 = vunpack.c.h.b16 %v303
    %v1020 = vunpack.c.l.b16 %v304
    %v1021 = vunpack.c.h.b16 %v304
    %v1022 = vunpack.c.l.b16 %v305
    %v1023 = vunpack.c.h.b16 %v305
    %v1024 = vunpack.c.l.b16 %v306
    %v1025 = vunpack.c.h.b16 %v306
    %v1026 = vunpack.c.l.b16 %v307
    %v1027 = vunpack.c.h.b16 %v307
    %v1028 = vunpack.c.l.b16 %v308
    %v1029 = vunpack.c.h.b16 %v308
    %v1030 = vunpack.c.l.b16 %v309
    %v1031 = vunpack.c.h.b16 %v309
    %v1032 = vunpack.c.l.b16 %v310
    %v1033 = vunpack.c.h.b16 %v310
    %v1034 = vunpack.c.l.b16 %v311
    %v1035 = vunpack.c.h.b16 %v311
    %v1036 = vunpack.c.l.b16 %v312
    %v1037 = vunpack.c.h.b16 %v312
    %v1038 = vunpack.c.l.b16 %v313
    %v1039 = vunpack.c.h.b16 %v313
    %v1040 = vunpack.c.l.b16 %v314
    %v1041 = vunpack.c.h.b16 %v314
    %v1042 = vunpack.c.l.b16 %v315
    %v1043 = vunpack.c.h.b16 %v315
    %v1044 = vunpack.c.l.b16 %v316
    %v1045 = vunpack.c.h.b16 %v316
    %v1046 = vunpack.c.l.b16 %v317
    %v1047 = vunpack.c.h.b16 %v317
    %v1048 = vunpack.c.l.b16 %v318
    %v1049 = vunpack.c.h.b16 %v318
    %v1050 = vunpack.c.l.b16 %v319
    %v1051 = vunpack.c.h.b16 %v319
    %v1052 = vunpack.c.l.b16 %v320
    %v1053 = vunpack.c.h.b16 %v320
    %v1054 = vunpack.c.l.b16 %v321
    %v1055 = vunpack.c.h.b16 %v321
    %v1056 = vunpack.c.l.b16 %v322
    %v1057 = vunpack.c.h.b16 %v322
    %v1058 = vunpack.c.l.b16 %v323
    %v1059 = vunpack.c.h.b16 %v323
    %v1060 = vunpack.c.l.b16 %v324
    %v1061 = vunpack.c.h.b16 %v324
    %v1062 = vunpack.c.l.b16 %v325
    %v1063 = vunpack.c.h.b16 %v325
    %v1064 = vunpack.c.l.b16 %v326
    %v1065 = vunpack.c.h.b16 %v326
    %v1066 = vunpack.c.l.b16 %v327
    %v1067 = vunpack.c.h.b16 %v327
    %v1068 = vunpack.c.l.b16 %v328
    %v1069 = vunpack.c.h.b16 %v328
    %v1070 = vunpack.c.l.b16 %v329
    %v1071 = vunpack.c.h.b16 %v329
    %v1072 = vunpack.c.l.b16 %v330
    %v1073 = vunpack.c.h.b16 %v330
    %v1074 = vunpack.c.l.b16 %v331
    %v1075 = vunpack.c.h.b16 %v331
    %v1076 = vunpack.c.l.b16 %v332
    %v1077 = vunpack.c.h.b16 %v332
    %v1078 = vunpack.c.l.b16 %v333
    %v1079 = vunpack.c.h.b16 %v333
    %v1080 = vunpack.c.l.b16 %v334
    %v1081 = vunpack.c.h.b16 %v334
    %v1082 = vunpack.c.l.b16 %v335
    %v1083 = vunpack.c.h.b16 %v335
    %v1084 = vunpack.c.l.b16 %v336
    %v1085 = vunpack.c.h.b16 %v336
    %v1086 = vunpack.c.l.b16 %v337
    %v1087 = vunpack.c.h.b16 %v337
    %v1088 = vunpack.c.l.b16 %v338
    %v1089 = vunpack.c.h.b16 %v338
    %v1090 = vunpack.c.l.b16 %v339
    %v1091 = vunpack.c.h.b16 %v339
    %v1092 = vunpack.c.l.b16 %v340
    %v1093 = vunpack.c.h.b16 %v340
    %v1094 = vunpack.c.l.b16 %v341
    %v1095 = vunpack.c.h.b16 %v341
    %v1096 = vunpack.c.l.b16 %v342
    %v1097 = vunpack.c.h.b16 %v342
    %v1098 = vunpack.c.l.b16 %v343
    %v1099 = vunpack.c.h.b16 %v343
    %v1100 = vunpack.c.l.b16 %v344
    %v1101 = vunpack.c.h.b16 %v344
    %v1102 = vunpack.c.l.b16 %v345
    %v1103 = vunpack.c.h.b16 %v345
    %v1104 = vunpack.c.l.b16 %v346
    %v1105 = vunpack.c.h.b16 %v346
    %v1106 = vunpack.c.l.b16 %v347
    %v1107 = vunpack.c.h.b16 %v347
    %v1108 = vunpack.c.l.b16 %v348
    %v1109 = vunpack.c.h.b16 %v348
    %v1110 = vunpack.c.l.b16 %v349
    %v1111 = vunpack.c.h.b16 %v349
    %v1112 = vunpack.c.l.b16 %v350
    %v1113 = vunpack.c.h.b16 %v350
    %v1114 = vunpack.c.l.b16 %v351
    %v1115 = vunpack.c.h.b16 %v351
    %v1116 = vunpack.c.l.b16 %v352
    %v1117 = vunpack.c.h.b16 %v352
    %v1118 = vunpack.c.l.b16 %v353
    %v1119 = vunpack.c.h.b16 %v353
    %v1120 = vunpack.c.l.b16 %v354
    %v1121 = vunpack.c.h.b16 %v354
    %v1122 = vunpack.c.l.b16 %v355
    %v1123 = vunpack.c.h.b16 %v355
    %v1124 = vunpack.c.l.b16 %v356
    %v1125 = vunpack.c.h.b16 %v356
    %v1126 = vunpack.c.l.b16 %v357
    %v1127 = vunpack.c.h.b16 %v357
    %v1128 = vunpack.c.l.b16 %v358
    %v1129 = vunpack.c.h.b16 %v358
    %v1130 = vunpack.c.l.b16 %v359
    %v1131 = vunpack.c.h.b16 %v359
    %v1132 = vunpack.c.l.b16 %v360
    %v1133 = vunpack.c.h.b16 %v360
    %v1134 = vunpack.c.l.b16 %v361
    %v1135 = vunpack.c.h.b16 %v361
    %v1136 = vunpack.c.l.b16 %v362
    %v1137 = vunpack.c.h.b16 %v362
    %v1138 = vunpack.c.l.b16 %v363
    %v1139 = vunpack.c.h.b16 %v363
    %v1140 = vunpack.c.l.b16 %v364
    %v1141 = vunpack.c.h.b16 %v364
    %v1142 = vunpack.c.l.b16 %v365
    %v1143 = vunpack.c.h.b16 %v365
    %v1144 = vunpack.c.l.b16 %v366
    %v1145 = vunpack.c.h.b16 %v366
    %v1146 = vunpack.c.l.b16 %v367
    %v1147 = vunpack.c.h.b16 %v367
    %v1148 = vunpack.c.l.b16 %v368
    %v1149 = vunpack.c.h.b16 %v368
    %v1150 = vunpack.c.l.b16 %v369
    %v1151 = vunpack.c.h.b16 %v369
    %v1152 = vunpack.c.l.b16 %v370
    %v1153 = vunpack.c.h.b16 %v370
    %v1154 = vunpack.c.l.b16 %v371
    %v1155 = vunpack.c.h.b16 %v371
    %v1156 = vunpack.c.l.b16 %v372
    %v1157 = vunpack.c.h.b16 %v372
    %v1158 = vunpack.c.l.b16 %v373
    %v1159 = vunpack.c.h.b16 %v373
    %v1160 = vunpack.c.l.b16 %v374
    %v1161 = vunpack.c.h.b16 %v374
    %v1162 = vunpack.c.l.b16 %v375
    %v1163 = vunpack.c.h.b16 %v375
    %v1164 = vunpack.c.l.b16 %v376
    %v1165 = vunpack.c.h.b16 %v376
    %v1166 = vunpack.c.l.b16 %v377
    %v1167 = vunpack.c.h.b16 %v377
    %v1168 = vpack.c.b16 %v660, %v656
    %v1169 = vpack.c.b16 %v661, %v657
    %v1170 = vpack.c.b16 %v662, %v658
    %v1171 = vpack.c.b16 %v663, %v659
    %v1172 = vpack.c.b16 %v668, %v664
    %v1173 = vpack.c.b16 %v669, %v665
    %v1174 = vpack.c.b16 %v670, %v666
    %v1175 = vpack.c.b16 %v671, %v667
    %v1176 = vpack.c.b16 %v676, %v672
    %v1177 = vpack.c.b16 %v677, %v673
    %v1178 = vpack.c.b16 %v678, %v674
    %v1179 = vpack.c.b16 %v679, %v675
    %v1180 = vpack.c.b16 %v684, %v680
    %v1181 = vpack.c.b16 %v685, %v681
    %v1182 = vpack.c.b16 %v686, %v682
    %v1183 = vpack.c.b16 %v687, %v683
    %v1184 = vpack.c.b16 %v692, %v688
    %v1185 = vpack.c.b16 %v693, %v689
    %v1186 = vpack.c.b16 %v694, %v690
    %v1187 = vpack.c.b16 %v695, %v691
    %v1188 = vpack.c.b16 %v700, %v696
    %v1189 = vpack.c.b16 %v701, %v697
    %v1190 = vpack.c.b16 %v702, %v698
    %v1191 = vpack.c.b16 %v703, %v699
    %v1192 = vpack.c.b16 %v708, %v704
    %v1193 = vpack.c.b16 %v709, %v705
    %v1194 = vpack.c.b16 %v710, %v706
    %v1195 = vpack.c.b16 %v711, %v707
    %v1196 = vpack.c.b16 %v716, %v712
    %v1197 = vpack.c.b16 %v717, %v713
    %v1198 = vpack.c.b16 %v718, %v714
    %v1199 = vpack.c.b16 %v719, %v715
    %v1200 = vpack.c.b16 %v724, %v720
    %v1201 = vpack.c.b16 %v725, %v721
    %v1202 = vpack.c.b16 %v726, %v722
    %v1203 = vpack.c.b16 %v727, %v723
    %v1204 = vpack.c.b16 %v732, %v728
    %v1205 = vpack.c.b16 %v733, %v729
    %v1206 = vpack.c.b16 %v734, %v730
    %v1207 = vpack.c.b16 %v735, %v731
    %v1208 = vpack.c.b16 %v740, %v736
    %v1209 = vpack.c.b16 %v741, %v737
    %v1210 = vpack.c.b16 %v742, %v738
    %v1211 = vpack.c.b16 %v743, %v739
    %v1212 = vpack.c.b16 %v748, %v744
    %v1213 = vpack.c.b16 %v749, %v745
    %v1214 = vpack.c.b16 %v750, %v746
    %v1215 = vpack.c.b16 %v751, %v747
    %v1216 = vpack.c.b16 %v756, %v752
    %v1217 = vpack.c.b16 %v757, %v753
    %v1218 = vpack.c.b16 %v758, %v754
    %v1219 = vpack.c.b16 %v759, %v755
    %v1220 = vpack.c.b16 %v764, %v760
    %v1221 = vpack.c.b16 %v765, %v761
    %v1222 = vpack.c.b16 %v766, %v762
    %v1223 = vpack.c.b16 %v767, %v763
    %v1224 = vpack.c.b16 %v772, %v768
    %v1225 = vpack.c.b16 %v773, %v769
    %v1226 = vpack.c.b16 %v774, %v770
    %v1227 = vpack.c.b16 %v775, %v771
    %v1228 = vpack.c.b16 %v780, %v776
    %v1229 = vpack.c.b16 %v781, %v777
    %v1230 = vpack.c.b16 %v782, %v778
    %v1231 = vpack.c.b16 %v783, %v779
    %v1232 = vpack.c.b16 %v788, %v784
    %v1233 = vpack.c.b16 %v789, %v785
    %v1234 = vpack.c.b16 %v790, %v786
    %v1235 = vpack.c.b16 %v791, %v787
    %v1236 = vpack.c.b16 %v796, %v792
    %v1237 = vpack.c.b16 %v797, %v793
    %v1238 = vpack.c.b16 %v798, %v794
    %v1239 = vpack.c.b16 %v799, %v795
    %v1240 = vpack.c.b16 %v804, %v800
    %v1241 = vpack.c.b16 %v805, %v801
    %v1242 = vpack.c.b16 %v806, %v802
    %v1243 = vpack.c.b16 %v807, %v803
    %v1244 = vpack.c.b16 %v812, %v808
    %v1245 = vpack.c.b16 %v813, %v809
    %v1246 = vpack.c.b16 %v814, %v810
    %v1247 = vpack.c.b16 %v815, %v811
    %v1248 = vpack.c.b16 %v820, %v816
    %v1249 = vpack.c.b16 %v821, %v817
    %v1250 = vpack.c.b16 %v822, %v818
    %v1251 = vpack.c.b16 %v823, %v819
    %v1252 = vpack.c.b16 %v828, %v824
    %v1253 = vpack.c.b16 %v829, %v825
    %v1254 = vpack.c.b16 %v830, %v826
    %v1255 = vpack.c.b16 %v831, %v827
    %v1256 = vpack.c.b16 %v836, %v832
    %v1257 = vpack.c.b16 %v837, %v833
    %v1258 = vpack.c.b16 %v838, %v834
    %v1259 = vpack.c.b16 %v839, %v835
    %v1260 = vpack.c.b16 %v844, %v840
    %v1261 = vpack.c.b16 %v845, %v841
    %v1262 = vpack.c.b16 %v846, %v842
    %v1263 = vpack.c.b16 %v847, %v843
    %v1264 = vpack.c.b16 %v852, %v848
    %v1265 = vpack.c.b16 %v853, %v849
    %v1266 = vpack.c.b16 %v854, %v850
    %v1267 = vpack.c.b16 %v855, %v851
    %v1268 = vpack.c.b16 %v860, %v856
    %v1269 = vpack.c.b16 %v861, %v857
    %v1270 = vpack.c.b16 %v862, %v858
    %v1271 = vpack.c.b16 %v863, %v859
    %v1272 = vpack.c.b16 %v868, %v864
    %v1273 = vpack.c.b16 %v869, %v865
    %v1274 = vpack.c.b16 %v870, %v866
    %v1275 = vpack.c.b16 %v871, %v867
    %v1276 = vpack.c.b16 %v876, %v872
    %v1277 = vpack.c.b16 %v877, %v873
    %v1278 = vpack.c.b16 %v878, %v874
    %v1279 = vpack.c.b16 %v879, %v875
    %v1280 = vpack.c.b16 %v884, %v880
    %v1281 = vpack.c.b16 %v885, %v881
    %v1282 = vpack.c.b16 %v886, %v882
    %v1283 = vpack.c.b16 %v887, %v883
    %v1284 = vpack.c.b16 %v892, %v888
    %v1285 = vpack.c.b16 %v893, %v889
    %v1286 = vpack.c.b16 %v894, %v890
    %v1287 = vpack.c.b16 %v895, %v891
    %v1288 = vpack.c.b16 %v900, %v896
    %v1289 = vpack.c.b16 %v901, %v897
    %v1290 = vpack.c.b16 %v902, %v898
    %v1291 = vpack.c.b16 %v903, %v899
    %v1292 = vpack.c.b16 %v908, %v904
    %v1293 = vpack.c.b16 %v909, %v905
    %v1294 = vpack.c.b16 %v910, %v906
    %v1295 = vpack.c.b16 %v911, %v907
    %v1296 = vpack.c.b16 %v916, %v912
    %v1297 = vpack.c.b16 %v917, %v913
    %v1298 = vpack.c.b16 %v918, %v914
    %v1299 = vpack.c.b16 %v919, %v915
    %v1300 = vpack.c.b16 %v924, %v920
    %v1301 = vpack.c.b16 %v925, %v921
    %v1302 = vpack.c.b16 %v926, %v922
    %v1303 = vpack.c.b16 %v927, %v923
    %v1304 = vpack.c.b16 %v932, %v928
    %v1305 = vpack.c.b16 %v933, %v929
    %v1306 = vpack.c.b16 %v934, %v930
    %v1307 = vpack.c.b16 %v935, %v931
    %v1308 = vpack.c.b16 %v940, %v936
    %v1309 = vpack.c.b16 %v941, %v937
    %v1310 = vpack.c.b16 %v942, %v938
    %v1311 = vpack.c.b16 %v943, %v939
    %v1312 = vpack.c.b16 %v948, %v944
    %v1313 = vpack.c.b16 %v949, %v945
    %v1314 = vpack.c.b16 %v950, %v946
    %v1315 = vpack.c.b16 %v951, %v947
    %v1316 = vpack.c.b16 %v956, %v952
    %v1317 = vpack.c.b16 %v957, %v953
    %v1318 = vpack.c.b16 %v958, %v954
    %v1319 = vpack.c.b16 %v959, %v955
    %v1320 = vpack.c.b16 %v964, %v960
    %v1321 = vpack.c.b16 %v965, %v961
    %v1322 = vpack.c.b16 %v966, %v962
    %v1323 = vpack.c.b16 %v967, %v963
    %v1324 = vpack.c.b16 %v972, %v968
    %v1325 = vpack.c.b16 %v973, %v969
    %v1326 = vpack.c.b16 %v974, %v970
    %v1327 = vpack.c.b16 %v975, %v971
    %v1328 = vpack.c.b16 %v980, %v976
    %v1329 = vpack.c.b16 %v981, %v977
    %v1330 = vpack.c.b16 %v982, %v978
    %v1331 = vpack.c.b16 %v983, %v979
    %v1332 = vpack.c.b16 %v988, %v984
    %v1333 = vpack.c.b16 %v989, %v985
    %v1334 = vpack.c.b16 %v990, %v986
    %v1335 = vpack.c.b16 %v991, %v987
    %v1336 = vpack.c.b16 %v996, %v992
    %v1337 = vpack.c.b16 %v997, %v993
    %v1338 = vpack.c.b16 %v998, %v994
    %v1339 = vpack.c.b16 %v999, %v995
    %v1340 = vpack.c.b16 %v1004, %v1000
    %v1341 = vpack.c.b16 %v1005, %v1001
    %v1342 = vpack.c.b16 %v1006, %v1002
    %v1343 = vpack.c.b16 %v1007, %v1003
    %v1344 = vpack.c.b16 %v1012, %v1008
    %v1345 = vpack.c.b16 %v1013, %v1009
    %v1346 = vpack.c.b16 %v1014, %v1010
    %v1347 = vpack.c.b16 %v1015, %v1011
    %v1348 = vpack.c.b16 %v1020, %v1016
    %v1349 = vpack.c.b16 %v1021, %v1017
    %v1350 = vpack.c.b16 %v1022, %v1018
    %v1351 = vpack.c.b16 %v1023, %v1019
    %v1352 = vpack.c.b16 %v1028, %v1024
    %v1353 = vpack.c.b16 %v1029, %v1025
    %v1354 = vpack.c.b16 %v1030, %v1026
    %v1355 = vpack.c.b16 %v1031, %v1027
    %v1356 = vpack.c.b16 %v1036, %v1032
    %v1357 = vpack.c.b16 %v1037, %v1033
    %v1358 = vpack.c.b16 %v1038, %v1034
    %v1359 = vpack.c.b16 %v1039, %v1035
    %v1360 = vpack.c.b16 %v1044, %v1040
    %v1361 = vpack.c.b16 %v1045, %v1041
    %v1362 = vpack.c.b16 %v1046, %v1042
    %v1363 = vpack.c.b16 %v1047, %v1043
    %v1364 = vpack.c.b16 %v1052, %v1048
    %v1365 = vpack.c.b16 %v1053, %v1049
    %v1366 = vpack.c.b16 %v1054, %v1050
    %v1367 = vpack.c.b16 %v1055, %v1051
    %v1368 = vpack.c.b16 %v1060, %v1056
    %v1369 = vpack.c.b16 %v1061, %v1057
    %v1370 = vpack.c.b16 %v1062, %v1058
    %v1371 = vpack.c.b16 %v1063, %v1059
    %v1372 = vpack.c.b16 %v1068, %v1064
    %v1373 = vpack.c.b16 %v1069, %v1065
    %v1374 = vpack.c.b16 %v1070, %v1066
    %v1375 = vpack.c.b16 %v1071, %v1067
    %v1376 = vpack.c.b16 %v1076, %v1072
    %v1377 = vpack.c.b16 %v1077, %v1073
    %v1378 = vpack.c.b16 %v1078, %v1074
    %v1379 = vpack.c.b16 %v1079, %v1075
    %v1380 = vpack.c.b16 %v1084, %v1080
    %v1381 = vpack.c.b16 %v1085, %v1081
    %v1382 = vpack.c.b16 %v1086, %v1082
    %v1383 = vpack.c.b16 %v1087, %v1083
    %v1384 = vpack.c.b16 %v1092, %v1088
    %v1385 = vpack.c.b16 %v1093, %v1089
    %v1386 = vpack.c.b16 %v1094, %v1090
    %v1387 = vpack.c.b16 %v1095, %v1091
    %v1388 = vpack.c.b16 %v1100, %v1096
    %v1389 = vpack.c.b16 %v1101, %v1097
    %v1390 = vpack.c.b16 %v1102, %v1098
    %v1391 = vpack.c.b16 %v1103, %v1099
    %v1392 = vpack.c.b16 %v1108, %v1104
    %v1393 = vpack.c.b16 %v1109, %v1105
    %v1394 = vpack.c.b16 %v1110, %v1106
    %v1395 = vpack.c.b16 %v1111, %v1107
    %v1396 = vpack.c.b16 %v1116, %v1112
    %v1397 = vpack.c.b16 %v1117, %v1113
    %v1398 = vpack.c.b16 %v1118, %v1114
    %v1399 = vpack.c.b16 %v1119, %v1115
    %v1400 = vpack.c.b16 %v1124, %v1120
    %v1401 = vpack.c.b16 %v1125, %v1121
    %v1402 = vpack.c.b16 %v1126, %v1122
    %v1403 = vpack.c.b16 %v1127, %v1123
    %v1404 = vpack.c.b16 %v1132, %v1128
    %v1405 = vpack.c.b16 %v1133, %v1129
    %v1406 = vpack.c.b16 %v1134, %v1130
    %v1407 = vpack.c.b16 %v1135, %v1131
    %v1408 = vpack.c.b16 %v1140, %v1136
    %v1409 = vpack.c.b16 %v1141, %v1137
    %v1410 = vpack.c.b16 %v1142, %v1138
    %v1411 = vpack.c.b16 %v1143, %v1139
    %v1412 = vpack.c.b16 %v1148, %v1144
    %v1413 = vpack.c.b16 %v1149, %v1145
    %v1414 = vpack.c.b16 %v1150, %v1146
    %v1415 = vpack.c.b16 %v1151, %v1147
    %v1416 = vpack.c.b16 %v1156, %v1152
    %v1417 = vpack.c.b16 %v1157, %v1153
    %v1418 = vpack.c.b16 %v1158, %v1154
    %v1419 = vpack.c.b16 %v1159, %v1155
    %v1420 = vpack.c.b16 %v1164, %v1160
    %v1421 = vpack.c.b16 %v1165, %v1161
    %v1422 = vpack.c.b16 %v1166, %v1162
    %v1423 = vpack.c.b16 %v1167, %v1163
    %1680 = vmatprep.subr.bf16.mxu0 %v1169
    %1681 = vmatpush1.bf16.msra.mxu0 %v1168
    %1682 = vmatprep.subr.bf16.mxu0 %v1173
    %1683 = vmatpush1.bf16.msra.mxu0 %v1172
    %1684 = vmatprep.subr.bf16.mxu0 %v1177
    %1685 = vmatpush1.bf16.msra.mxu0 %v1176
    %1686 = vmatprep.subr.bf16.mxu0 %v1181
    %1687 = vmatpush1.bf16.msra.mxu0 %v1180
    %1688 = vmatprep.subr.bf16.mxu0 %v1185
    %1689 = vmatpush1.bf16.msra.mxu0 %v1184
    %1690 = vmatprep.subr.bf16.mxu0 %v1189
    %1691 = vmatpush1.bf16.msra.mxu0 %v1188
    %1692 = vmatprep.subr.bf16.mxu0 %v1193
    %1693 = vmatpush1.bf16.msra.mxu0 %v1192
    %1694 = vmatprep.subr.bf16.mxu0 %v1197
    %1695 = vmatpush1.bf16.msra.mxu0 %v1196
    %1696 = vmatprep.subr.bf16.mxu0 %v1201
    %1697 = vmatpush1.bf16.msra.mxu0 %v1200
    %1698 = vmatprep.subr.bf16.mxu0 %v1205
    %1699 = vmatpush1.bf16.msra.mxu0 %v1204
    %1700 = vmatprep.subr.bf16.mxu0 %v1209
    %1701 = vmatpush1.bf16.msra.mxu0 %v1208
    %1702 = vmatprep.subr.bf16.mxu0 %v1213
    %1703 = vmatpush1.bf16.msra.mxu0 %v1212
    %1704 = vmatprep.subr.bf16.mxu0 %v1217
    %1705 = vmatpush1.bf16.msra.mxu0 %v1216
    %1706 = vmatprep.subr.bf16.mxu0 %v1221
    %1707 = vmatpush1.bf16.msra.mxu0 %v1220
    %1708 = vmatprep.subr.bf16.mxu0 %v1225
    %1709 = vmatpush1.bf16.msra.mxu0 %v1224
    %1710 = vmatprep.subr.bf16.mxu0 %v1229
    %1711 = vmatpush1.bf16.msra.mxu0 %v1228
    %1712 = vmatprep.mubr.bf16.mxu0 %v115
    %1713 = vmatmul.mubr.bf16.gmra.mrb[0].mxu0 %v114
    %v1714 = vpop.f32.mrb[0].mxu0
    %v1715 = vadd.f32 %v383, %v1714
    %v1716 = vpop.f32.mrb[0].mxu0
    %v1717 = vadd.f32 %v387, %v1716
    %v1718 = vpop.f32.mrb[0].mxu0
    %v1719 = vpop.f32.mrb[0].mxu0
    %1720 = vdwg.mxu0
    %1721 = vmatprep.subr.bf16.mxu0 %v1233
    %1722 = vmatpush1.bf16.msra.mxu0 %v1232
    %1723 = vmatprep.subr.bf16.mxu0 %v1237
    %1724 = vmatpush1.bf16.msra.mxu0 %v1236
    %1725 = vmatprep.subr.bf16.mxu0 %v1241
    %1726 = vmatpush1.bf16.msra.mxu0 %v1240
    %1727 = vmatprep.subr.bf16.mxu0 %v1245
    %1728 = vmatpush1.bf16.msra.mxu0 %v1244
    %1729 = vmatprep.subr.bf16.mxu0 %v1249
    %1730 = vmatpush1.bf16.msra.mxu0 %v1248
    %1731 = vmatprep.subr.bf16.mxu0 %v1253
    %1732 = vmatpush1.bf16.msra.mxu0 %v1252
    %1733 = vmatprep.subr.bf16.mxu0 %v1257
    %1734 = vmatpush1.bf16.msra.mxu0 %v1256
    %1735 = vmatprep.subr.bf16.mxu0 %v1261
    %1736 = vmatpush1.bf16.msra.mxu0 %v1260
    %1737 = vmatprep.subr.bf16.mxu0 %v1265
    %1738 = vmatpush1.bf16.msra.mxu0 %v1264
    %1739 = vmatprep.subr.bf16.mxu0 %v1269
    %1740 = vmatpush1.bf16.msra.mxu0 %v1268
    %1741 = vmatprep.subr.bf16.mxu0 %v1273
    %1742 = vmatpush1.bf16.msra.mxu0 %v1272
    %1743 = vmatprep.subr.bf16.mxu0 %v1277
    %1744 = vmatpush1.bf16.msra.mxu0 %v1276
    %1745 = vmatprep.subr.bf16.mxu0 %v1281
    %1746 = vmatpush1.bf16.msra.mxu0 %v1280
    %1747 = vmatprep.subr.bf16.mxu0 %v1285
    %1748 = vmatpush1.bf16.msra.mxu0 %v1284
    %1749 = vmatprep.subr.bf16.mxu0 %v1289
    %1750 = vmatpush1.bf16.msra.mxu0 %v1288
    %1751 = vmatprep.subr.bf16.mxu0 %v1293
    %1752 = vmatpush1.bf16.msra.mxu0 %v1292
    %1753 = vmatprep.mubr.bf16.mxu0 %v117
    %1754 = vmatmul.mubr.bf16.gmra.mrb[0].mxu0 %v116
    %v1755 = vpop.f32.mrb[0].mxu0
    %v1756 = vadd.f32 %v1715, %v1755
    %v1757 = vpop.f32.mrb[0].mxu0
    %v1758 = vadd.f32 %v1717, %v1757
    %v1759 = vpop.f32.mrb[0].mxu0
    %v1760 = vpop.f32.mrb[0].mxu0
    %1761 = vdwg.mxu0
    %1762 = vmatprep.subr.bf16.mxu0 %v1297
    %1763 = vmatpush1.bf16.msra.mxu0 %v1296
    %1764 = vmatprep.subr.bf16.mxu0 %v1301
    %1765 = vmatpush1.bf16.msra.mxu0 %v1300
    %1766 = vmatprep.subr.bf16.mxu0 %v1305
    %1767 = vmatpush1.bf16.msra.mxu0 %v1304
    %1768 = vmatprep.subr.bf16.mxu0 %v1309
    %1769 = vmatpush1.bf16.msra.mxu0 %v1308
    %1770 = vmatprep.subr.bf16.mxu0 %v1313
    %1771 = vmatpush1.bf16.msra.mxu0 %v1312
    %1772 = vmatprep.subr.bf16.mxu0 %v1317
    %1773 = vmatpush1.bf16.msra.mxu0 %v1316
    %1774 = vmatprep.subr.bf16.mxu0 %v1321
    %1775 = vmatpush1.bf16.msra.mxu0 %v1320
    %1776 = vmatprep.subr.bf16.mxu0 %v1325
    %1777 = vmatpush1.bf16.msra.mxu0 %v1324
    %1778 = vmatprep.subr.bf16.mxu0 %v1329
    %1779 = vmatpush1.bf16.msra.mxu0 %v1328
    %1780 = vmatprep.subr.bf16.mxu0 %v1333
    %1781 = vmatpush1.bf16.msra.mxu0 %v1332
    %1782 = vmatprep.subr.bf16.mxu0 %v1337
    %1783 = vmatpush1.bf16.msra.mxu0 %v1336
    %1784 = vmatprep.subr.bf16.mxu0 %v1341
    %1785 = vmatpush1.bf16.msra.mxu0 %v1340
    %1786 = vmatprep.subr.bf16.mxu0 %v1345
    %1787 = vmatpush1.bf16.msra.mxu0 %v1344
    %1788 = vmatprep.subr.bf16.mxu0 %v1349
    %1789 = vmatpush1.bf16.msra.mxu0 %v1348
    %1790 = vmatprep.subr.bf16.mxu0 %v1353
    %1791 = vmatpush1.bf16.msra.mxu0 %v1352
    %1792 = vmatprep.subr.bf16.mxu0 %v1357
    %1793 = vmatpush1.bf16.msra.mxu0 %v1356
    %1794 = vmatprep.mubr.bf16.mxu0 %v119
    %1795 = vmatmul.mubr.bf16.gmra.mrb[0].mxu0 %v118
    %v1796 = vpop.f32.mrb[0].mxu0
    %v1797 = vadd.f32 %v1756, %v1796
    %v1798 = vpop.f32.mrb[0].mxu0
    %v1799 = vadd.f32 %v1758, %v1798
    %v1800 = vpop.f32.mrb[0].mxu0
    %v1801 = vpop.f32.mrb[0].mxu0
    %1802 = vdwg.mxu0
    %1803 = vmatprep.subr.bf16.mxu0 %v1361
    %1804 = vmatpush1.bf16.msra.mxu0 %v1360
    %1805 = vmatprep.subr.bf16.mxu0 %v1365
    %1806 = vmatpush1.bf16.msra.mxu0 %v1364
    %1807 = vmatprep.subr.bf16.mxu0 %v1369
    %1808 = vmatpush1.bf16.msra.mxu0 %v1368
    %1809 = vmatprep.subr.bf16.mxu0 %v1373
    %1810 = vmatpush1.bf16.msra.mxu0 %v1372
    %1811 = vmatprep.subr.bf16.mxu0 %v1377
    %1812 = vmatpush1.bf16.msra.mxu0 %v1376
    %1813 = vmatprep.subr.bf16.mxu0 %v1381
    %1814 = vmatpush1.bf16.msra.mxu0 %v1380
    %1815 = vmatprep.subr.bf16.mxu0 %v1385
    %1816 = vmatpush1.bf16.msra.mxu0 %v1384
    %1817 = vmatprep.subr.bf16.mxu0 %v1389
    %1818 = vmatpush1.bf16.msra.mxu0 %v1388
    %1819 = vmatprep.subr.bf16.mxu0 %v1393
    %1820 = vmatpush1.bf16.msra.mxu0 %v1392
    %1821 = vmatprep.subr.bf16.mxu0 %v1397
    %1822 = vmatpush1.bf16.msra.mxu0 %v1396
    %1823 = vmatprep.subr.bf16.mxu0 %v1401
    %1824 = vmatpush1.bf16.msra.mxu0 %v1400
    %1825 = vmatprep.subr.bf16.mxu0 %v1405
    %1826 = vmatpush1.bf16.msra.mxu0 %v1404
    %1827 = vmatprep.subr.bf16.mxu0 %v1409
    %1828 = vmatpush1.bf16.msra.mxu0 %v1408
    %1829 = vmatprep.subr.bf16.mxu0 %v1413
    %1830 = vmatpush1.bf16.msra.mxu0 %v1412
    %1831 = vmatprep.subr.bf16.mxu0 %v1417
    %1832 = vmatpush1.bf16.msra.mxu0 %v1416
    %1833 = vmatprep.subr.bf16.mxu0 %v1421
    %1834 = vmatpush1.bf16.msra.mxu0 %v1420
    %1835 = vmatprep.mubr.bf16.mxu0 %v121
    %1836 = vmatmul.mubr.bf16.gmra.mrb[0].mxu0 %v120
    %v1837 = vpop.f32.mrb[0].mxu0
    %v1838 = vadd.f32 %v1797, %v1837
    %v1839 = vpop.f32.mrb[0].mxu0
    %v1840 = vadd.f32 %v1799, %v1839
    %v1841 = vpop.f32.mrb[0].mxu0
    %v1842 = vpop.f32.mrb[0].mxu0
    %1843 = vdwg.mxu0
    %1844 = vmatprep.subr.bf16.mxu0 %v1171
    %1845 = vmatpush1.bf16.msra.mxu0 %v1170
    %1846 = vmatprep.subr.bf16.mxu0 %v1175
    %1847 = vmatpush1.bf16.msra.mxu0 %v1174
    %1848 = vmatprep.subr.bf16.mxu0 %v1179
    %1849 = vmatpush1.bf16.msra.mxu0 %v1178
    %1850 = vmatprep.subr.bf16.mxu0 %v1183
    %1851 = vmatpush1.bf16.msra.mxu0 %v1182
    %1852 = vmatprep.subr.bf16.mxu0 %v1187
    %1853 = vmatpush1.bf16.msra.mxu0 %v1186
    %1854 = vmatprep.subr.bf16.mxu0 %v1191
    %1855 = vmatpush1.bf16.msra.mxu0 %v1190
    %1856 = vmatprep.subr.bf16.mxu0 %v1195
    %1857 = vmatpush1.bf16.msra.mxu0 %v1194
    %1858 = vmatprep.subr.bf16.mxu0 %v1199
    %1859 = vmatpush1.bf16.msra.mxu0 %v1198
    %1860 = vmatprep.subr.bf16.mxu0 %v1203
    %1861 = vmatpush1.bf16.msra.mxu0 %v1202
    %1862 = vmatprep.subr.bf16.mxu0 %v1207
    %1863 = vmatpush1.bf16.msra.mxu0 %v1206
    %1864 = vmatprep.subr.bf16.mxu0 %v1211
    %1865 = vmatpush1.bf16.msra.mxu0 %v1210
    %1866 = vmatprep.subr.bf16.mxu0 %v1215
    %1867 = vmatpush1.bf16.msra.mxu0 %v1214
    %1868 = vmatprep.subr.bf16.mxu0 %v1219
    %1869 = vmatpush1.bf16.msra.mxu0 %v1218
    %1870 = vmatprep.subr.bf16.mxu0 %v1223
    %1871 = vmatpush1.bf16.msra.mxu0 %v1222
    %1872 = vmatprep.subr.bf16.mxu0 %v1227
    %1873 = vmatpush1.bf16.msra.mxu0 %v1226
    %1874 = vmatprep.subr.bf16.mxu0 %v1231
    %1875 = vmatpush1.bf16.msra.mxu0 %v1230
    %1876 = vmatprep.mubr.bf16.mxu0 %v115
    %1877 = vmatmul.mubr.bf16.gmra.mrb[0].mxu0 %v114
    %v1878 = vpop.f32.mrb[0].mxu0
    %v1879 = vadd.f32 %v391, %v1878
    %v1880 = vpop.f32.mrb[0].mxu0
    %v1881 = vadd.f32 %v395, %v1880
    %v1882 = vpop.f32.mrb[0].mxu0
    %v1883 = vpop.f32.mrb[0].mxu0
    %1884 = vdwg.mxu0
    %1885 = vmatprep.subr.bf16.mxu0 %v1235
    %1886 = vmatpush1.bf16.msra.mxu0 %v1234
    %1887 = vmatprep.subr.bf16.mxu0 %v1239
    %1888 = vmatpush1.bf16.msra.mxu0 %v1238
    %1889 = vmatprep.subr.bf16.mxu0 %v1243
    %1890 = vmatpush1.bf16.msra.mxu0 %v1242
    %1891 = vmatprep.subr.bf16.mxu0 %v1247
    %1892 = vmatpush1.bf16.msra.mxu0 %v1246
    %1893 = vmatprep.subr.bf16.mxu0 %v1251
    %1894 = vmatpush1.bf16.msra.mxu0 %v1250
    %1895 = vmatprep.subr.bf16.mxu0 %v1255
    %1896 = vmatpush1.bf16.msra.mxu0 %v1254
    %1897 = vmatprep.subr.bf16.mxu0 %v1259
    %1898 = vmatpush1.bf16.msra.mxu0 %v1258
    %1899 = vmatprep.subr.bf16.mxu0 %v1263
    %1900 = vmatpush1.bf16.msra.mxu0 %v1262
    %1901 = vmatprep.subr.bf16.mxu0 %v1267
    %1902 = vmatpush1.bf16.msra.mxu0 %v1266
    %1903 = vmatprep.subr.bf16.mxu0 %v1271
    %1904 = vmatpush1.bf16.msra.mxu0 %v1270
    %1905 = vmatprep.subr.bf16.mxu0 %v1275
    %1906 = vmatpush1.bf16.msra.mxu0 %v1274
    %1907 = vmatprep.subr.bf16.mxu0 %v1279
    %1908 = vmatpush1.bf16.msra.mxu0 %v1278
    %1909 = vmatprep.subr.bf16.mxu0 %v1283
    %1910 = vmatpush1.bf16.msra.mxu0 %v1282
    %1911 = vmatprep.subr.bf16.mxu0 %v1287
    %1912 = vmatpush1.bf16.msra.mxu0 %v1286
    %1913 = vmatprep.subr.bf16.mxu0 %v1291
    %1914 = vmatpush1.bf16.msra.mxu0 %v1290
    %1915 = vmatprep.subr.bf16.mxu0 %v1295
    %1916 = vmatpush1.bf16.msra.mxu0 %v1294
    %1917 = vmatprep.mubr.bf16.mxu0 %v117
    %1918 = vmatmul.mubr.bf16.gmra.mrb[0].mxu0 %v116
    %v1919 = vpop.f32.mrb[0].mxu0
    %v1920 = vadd.f32 %v1879, %v1919
    %v1921 = vpop.f32.mrb[0].mxu0
    %v1922 = vadd.f32 %v1881, %v1921
    %v1923 = vpop.f32.mrb[0].mxu0
    %v1924 = vpop.f32.mrb[0].mxu0
    %1925 = vdwg.mxu0
    %1926 = vmatprep.subr.bf16.mxu0 %v1299
    %1927 = vmatpush1.bf16.msra.mxu0 %v1298
    %1928 = vmatprep.subr.bf16.mxu0 %v1303
    %1929 = vmatpush1.bf16.msra.mxu0 %v1302
    %1930 = vmatprep.subr.bf16.mxu0 %v1307
    %1931 = vmatpush1.bf16.msra.mxu0 %v1306
    %1932 = vmatprep.subr.bf16.mxu0 %v1311
    %1933 = vmatpush1.bf16.msra.mxu0 %v1310
    %1934 = vmatprep.subr.bf16.mxu0 %v1315
    %1935 = vmatpush1.bf16.msra.mxu0 %v1314
    %1936 = vmatprep.subr.bf16.mxu0 %v1319
    %1937 = vmatpush1.bf16.msra.mxu0 %v1318
    %1938 = vmatprep.subr.bf16.mxu0 %v1323
    %1939 = vmatpush1.bf16.msra.mxu0 %v1322
    %1940 = vmatprep.subr.bf16.mxu0 %v1327
    %1941 = vmatpush1.bf16.msra.mxu0 %v1326
    %1942 = vmatprep.subr.bf16.mxu0 %v1331
    %1943 = vmatpush1.bf16.msra.mxu0 %v1330
    %1944 = vmatprep.subr.bf16.mxu0 %v1335
    %1945 = vmatpush1.bf16.msra.mxu0 %v1334
    %1946 = vmatprep.subr.bf16.mxu0 %v1339
    %1947 = vmatpush1.bf16.msra.mxu0 %v1338
    %1948 = vmatprep.subr.bf16.mxu0 %v1343
    %1949 = vmatpush1.bf16.msra.mxu0 %v1342
    %1950 = vmatprep.subr.bf16.mxu0 %v1347
    %1951 = vmatpush1.bf16.msra.mxu0 %v1346
    %1952 = vmatprep.subr.bf16.mxu0 %v1351
    %1953 = vmatpush1.bf16.msra.mxu0 %v1350
    %1954 = vmatprep.subr.bf16.mxu0 %v1355
    %1955 = vmatpush1.bf16.msra.mxu0 %v1354
    %1956 = vmatprep.subr.bf16.mxu0 %v1359
    %1957 = vmatpush1.bf16.msra.mxu0 %v1358
    %1958 = vmatprep.mubr.bf16.mxu0 %v119
    %1959 = vmatmul.mubr.bf16.gmra.mrb[0].mxu0 %v118
    %v1960 = vpop.f32.mrb[0].mxu0
    %v1961 = vadd.f32 %v1920, %v1960
    %v1962 = vpop.f32.mrb[0].mxu0
    %v1963 = vadd.f32 %v1922, %v1962
    %v1964 = vpop.f32.mrb[0].mxu0
    %v1965 = vpop.f32.mrb[0].mxu0
    %1966 = vdwg.mxu0
    %1967 = vmatprep.subr.bf16.mxu0 %v1363
    %1968 = vmatpush1.bf16.msra.mxu0 %v1362
    %1969 = vmatprep.subr.bf16.mxu0 %v1367
    %1970 = vmatpush1.bf16.msra.mxu0 %v1366
    %1971 = vmatprep.subr.bf16.mxu0 %v1371
    %1972 = vmatpush1.bf16.msra.mxu0 %v1370
    %1973 = vmatprep.subr.bf16.mxu0 %v1375
    %1974 = vmatpush1.bf16.msra.mxu0 %v1374
    %1975 = vmatprep.subr.bf16.mxu0 %v1379
    %1976 = vmatpush1.bf16.msra.mxu0 %v1378
    %1977 = vmatprep.subr.bf16.mxu0 %v1383
    %1978 = vmatpush1.bf16.msra.mxu0 %v1382
    %1979 = vmatprep.subr.bf16.mxu0 %v1387
    %1980 = vmatpush1.bf16.msra.mxu0 %v1386
    %1981 = vmatprep.subr.bf16.mxu0 %v1391
    %1982 = vmatpush1.bf16.msra.mxu0 %v1390
    %1983 = vmatprep.subr.bf16.mxu0 %v1395
    %1984 = vmatpush1.bf16.msra.mxu0 %v1394
    %1985 = vmatprep.subr.bf16.mxu0 %v1399
    %1986 = vmatpush1.bf16.msra.mxu0 %v1398
    %1987 = vmatprep.subr.bf16.mxu0 %v1403
    %1988 = vmatpush1.bf16.msra.mxu0 %v1402
    %1989 = vmatprep.subr.bf16.mxu0 %v1407
    %1990 = vmatpush1.bf16.msra.mxu0 %v1406
    %1991 = vmatprep.subr.bf16.mxu0 %v1411
    %1992 = vmatpush1.bf16.msra.mxu0 %v1410
    %1993 = vmatprep.subr.bf16.mxu0 %v1415
    %1994 = vmatpush1.bf16.msra.mxu0 %v1414
    %1995 = vmatprep.subr.bf16.mxu0 %v1419
    %1996 = vmatpush1.bf16.msra.mxu0 %v1418
    %1997 = vmatprep.subr.bf16.mxu0 %v1423
    %1998 = vmatpush1.bf16.msra.mxu0 %v1422
    %1999 = vmatprep.mubr.bf16.mxu0 %v121
    %2000 = vmatmul.mubr.bf16.gmra.mrb[0].mxu0 %v120
    %v2001 = vpop.f32.mrb[0].mxu0
    %v2002 = vadd.f32 %v1961, %v2001
    %v2003 = vpop.f32.mrb[0].mxu0
    %v2004 = vadd.f32 %v1963, %v2003
    %v2005 = vpop.f32.mrb[0].mxu0
    %v2006 = vpop.f32.mrb[0].mxu0
    %2007 = vdwg.mxu0
    %v2008 = vmax.f32 %v1838, 0.0
    %v2009 = vmax.f32 %v1840, 0.0
    %v2010 = vmax.f32 %v2002, 0.0
    %v2011 = vmax.f32 %v2004, 0.0
    %v2012 = vpack.c.bf16 %v2008, %v2008
    %v2013 = vpack.c.bf16 %v2009, %v2009
    %v2014 = vpack.c.bf16 %v2010, %v2010
    %v2015 = vpack.c.bf16 %v2011, %v2011
    %v2016 = vld [vmem:[#allocation5] sm:$0xff]
    %v2017 = vld [vmem:[#allocation5 + $0x8] sm:$0xff]
    %v2018 = vld [vmem:[#allocation5 + $0x10] sm:$0xff]
    %v2019 = vld [vmem:[#allocation5 + $0x18] sm:$0xff]
    %v2020 = vld [vmem:[#allocation5 + $0x20] sm:$0xff]
    %v2021 = vld [vmem:[#allocation5 + $0x28] sm:$0xff]
    %v2022 = vld [vmem:[#allocation5 + $0x30] sm:$0xff]
    %v2023 = vld [vmem:[#allocation5 + $0x38] sm:$0xff]
    %v2024 = vld [vmem:[#allocation5 + $0x40] sm:$0xff]
    %v2025 = vld [vmem:[#allocation5 + $0x48] sm:$0xff]
    %v2026 = vld [vmem:[#allocation5 + $0x50] sm:$0xff]
    %v2027 = vld [vmem:[#allocation5 + $0x58] sm:$0xff]
    %v2028 = vld [vmem:[#allocation5 + $0x60] sm:$0xff]
    %v2029 = vld [vmem:[#allocation5 + $0x68] sm:$0xff]
    %v2030 = vld [vmem:[#allocation5 + $0x70] sm:$0xff]
    %v2031 = vld [vmem:[#allocation5 + $0x78] sm:$0xff]
    %v2032 = vld [vmem:[#allocation5 + $0x80] sm:$0xff]
    %v2033 = vld [vmem:[#allocation5 + $0x88] sm:$0xff]
    %v2034 = vld [vmem:[#allocation5 + $0x90] sm:$0xff]
    %v2035 = vld [vmem:[#allocation5 + $0x98] sm:$0xff]
    %v2036 = vld [vmem:[#allocation5 + $0xa0] sm:$0xff]
    %v2037 = vld [vmem:[#allocation5 + $0xa8] sm:$0xff]
    %v2038 = vld [vmem:[#allocation5 + $0xb0] sm:$0xff]
    %v2039 = vld [vmem:[#allocation5 + $0xb8] sm:$0xff]
    %v2040 = vld [vmem:[#allocation5 + $0xc0] sm:$0xff]
    %v2041 = vld [vmem:[#allocation5 + $0xc8] sm:$0xff]
    %v2042 = vld [vmem:[#allocation5 + $0xd0] sm:$0xff]
    %v2043 = vld [vmem:[#allocation5 + $0xd8] sm:$0xff]
    %v2044 = vld [vmem:[#allocation5 + $0xe0] sm:$0xff]
    %v2045 = vld [vmem:[#allocation5 + $0xe8] sm:$0xff]
    %v2046 = vld [vmem:[#allocation5 + $0xf0] sm:$0xff]
    %v2047 = vld [vmem:[#allocation5 + $0xf8] sm:$0xff]
    %v2048 = vld [vmem:[#allocation5 + $0x100] sm:$0xff]
    %v2049 = vld [vmem:[#allocation5 + $0x108] sm:$0xff]
    %v2050 = vld [vmem:[#allocation5 + $0x110] sm:$0xff]
    %v2051 = vld [vmem:[#allocation5 + $0x118] sm:$0xff]
    %v2052 = vld [vmem:[#allocation5 + $0x120] sm:$0xff]
    %v2053 = vld [vmem:[#allocation5 + $0x128] sm:$0xff]
    %v2054 = vld [vmem:[#allocation5 + $0x130] sm:$0xff]
    %v2055 = vld [vmem:[#allocation5 + $0x138] sm:$0xff]
    %v2056 = vld [vmem:[#allocation5 + $0x140] sm:$0xff]
    %v2057 = vld [vmem:[#allocation5 + $0x148] sm:$0xff]
    %v2058 = vld [vmem:[#allocation5 + $0x150] sm:$0xff]
    %v2059 = vld [vmem:[#allocation5 + $0x158] sm:$0xff]
    %v2060 = vld [vmem:[#allocation5 + $0x160] sm:$0xff]
    %v2061 = vld [vmem:[#allocation5 + $0x168] sm:$0xff]
    %v2062 = vld [vmem:[#allocation5 + $0x170] sm:$0xff]
    %v2063 = vld [vmem:[#allocation5 + $0x178] sm:$0xff]
    %v2064 = vld [vmem:[#allocation5 + $0x180] sm:$0xff]
    %v2065 = vld [vmem:[#allocation5 + $0x188] sm:$0xff]
    %v2066 = vld [vmem:[#allocation5 + $0x190] sm:$0xff]
    %v2067 = vld [vmem:[#allocation5 + $0x198] sm:$0xff]
    %v2068 = vld [vmem:[#allocation5 + $0x1a0] sm:$0xff]
    %v2069 = vld [vmem:[#allocation5 + $0x1a8] sm:$0xff]
    %v2070 = vld [vmem:[#allocation5 + $0x1b0] sm:$0xff]
    %v2071 = vld [vmem:[#allocation5 + $0x1b8] sm:$0xff]
    %v2072 = vld [vmem:[#allocation5 + $0x1c0] sm:$0xff]
    %v2073 = vld [vmem:[#allocation5 + $0x1c8] sm:$0xff]
    %v2074 = vld [vmem:[#allocation5 + $0x1d0] sm:$0xff]
    %v2075 = vld [vmem:[#allocation5 + $0x1d8] sm:$0xff]
    %v2076 = vld [vmem:[#allocation5 + $0x1e0] sm:$0xff]
    %v2077 = vld [vmem:[#allocation5 + $0x1e8] sm:$0xff]
    %v2078 = vld [vmem:[#allocation5 + $0x1f0] sm:$0xff]
    %v2079 = vld [vmem:[#allocation5 + $0x1f8] sm:$0xff]
    %v2080 = vld [vmem:[%s5] sm:$0x3]
    %v2082 = vlaneseq
    %v2083 = vshrl.u32 %v2082, 7
    %v2084 = vsub.s32 0, %v2083
    %v2085 = vrot.slane %v2080, %v2084
    %v2086 = vlaneseq
    %v2087 = vshrl.u32 %v2086, 7
    %v2088 = vsub.s32 1, %v2087
    %v2089 = vrot.slane %v2080, %v2088
    %v2156 = vunpack.c.l.b16 %v2016
    %v2157 = vunpack.c.h.b16 %v2016
    %v2158 = vunpack.c.l.b16 %v2017
    %v2159 = vunpack.c.h.b16 %v2017
    %v2160 = vunpack.c.l.b16 %v2018
    %v2161 = vunpack.c.h.b16 %v2018
    %v2162 = vunpack.c.l.b16 %v2019
    %v2163 = vunpack.c.h.b16 %v2019
    %v2164 = vunpack.c.l.b16 %v2020
    %v2165 = vunpack.c.h.b16 %v2020
    %v2166 = vunpack.c.l.b16 %v2021
    %v2167 = vunpack.c.h.b16 %v2021
    %v2168 = vunpack.c.l.b16 %v2022
    %v2169 = vunpack.c.h.b16 %v2022
    %v2170 = vunpack.c.l.b16 %v2023
    %v2171 = vunpack.c.h.b16 %v2023
    %v2172 = vunpack.c.l.b16 %v2024
    %v2173 = vunpack.c.h.b16 %v2024
    %v2174 = vunpack.c.l.b16 %v2025
    %v2175 = vunpack.c.h.b16 %v2025
    %v2176 = vunpack.c.l.b16 %v2026
    %v2177 = vunpack.c.h.b16 %v2026
    %v2178 = vunpack.c.l.b16 %v2027
    %v2179 = vunpack.c.h.b16 %v2027
    %v2180 = vunpack.c.l.b16 %v2028
    %v2181 = vunpack.c.h.b16 %v2028
    %v2182 = vunpack.c.l.b16 %v2029
    %v2183 = vunpack.c.h.b16 %v2029
    %v2184 = vunpack.c.l.b16 %v2030
    %v2185 = vunpack.c.h.b16 %v2030
    %v2186 = vunpack.c.l.b16 %v2031
    %v2187 = vunpack.c.h.b16 %v2031
    %v2188 = vunpack.c.l.b16 %v2032
    %v2189 = vunpack.c.h.b16 %v2032
    %v2190 = vunpack.c.l.b16 %v2033
    %v2191 = vunpack.c.h.b16 %v2033
    %v2192 = vunpack.c.l.b16 %v2034
    %v2193 = vunpack.c.h.b16 %v2034
    %v2194 = vunpack.c.l.b16 %v2035
    %v2195 = vunpack.c.h.b16 %v2035
    %v2196 = vunpack.c.l.b16 %v2036
    %v2197 = vunpack.c.h.b16 %v2036
    %v2198 = vunpack.c.l.b16 %v2037
    %v2199 = vunpack.c.h.b16 %v2037
    %v2200 = vunpack.c.l.b16 %v2038
    %v2201 = vunpack.c.h.b16 %v2038
    %v2202 = vunpack.c.l.b16 %v2039
    %v2203 = vunpack.c.h.b16 %v2039
    %v2204 = vunpack.c.l.b16 %v2040
    %v2205 = vunpack.c.h.b16 %v2040
    %v2206 = vunpack.c.l.b16 %v2041
    %v2207 = vunpack.c.h.b16 %v2041
    %v2208 = vunpack.c.l.b16 %v2042
    %v2209 = vunpack.c.h.b16 %v2042
    %v2210 = vunpack.c.l.b16 %v2043
    %v2211 = vunpack.c.h.b16 %v2043
    %v2212 = vunpack.c.l.b16 %v2044
    %v2213 = vunpack.c.h.b16 %v2044
    %v2214 = vunpack.c.l.b16 %v2045
    %v2215 = vunpack.c.h.b16 %v2045
    %v2216 = vunpack.c.l.b16 %v2046
    %v2217 = vunpack.c.h.b16 %v2046
    %v2218 = vunpack.c.l.b16 %v2047
    %v2219 = vunpack.c.h.b16 %v2047
    %v2220 = vunpack.c.l.b16 %v2048
    %v2221 = vunpack.c.h.b16 %v2048
    %v2222 = vunpack.c.l.b16 %v2049
    %v2223 = vunpack.c.h.b16 %v2049
    %v2224 = vunpack.c.l.b16 %v2050
    %v2225 = vunpack.c.h.b16 %v2050
    %v2226 = vunpack.c.l.b16 %v2051
    %v2227 = vunpack.c.h.b16 %v2051
    %v2228 = vunpack.c.l.b16 %v2052
    %v2229 = vunpack.c.h.b16 %v2052
    %v2230 = vunpack.c.l.b16 %v2053
    %v2231 = vunpack.c.h.b16 %v2053
    %v2232 = vunpack.c.l.b16 %v2054
    %v2233 = vunpack.c.h.b16 %v2054
    %v2234 = vunpack.c.l.b16 %v2055
    %v2235 = vunpack.c.h.b16 %v2055
    %v2236 = vunpack.c.l.b16 %v2056
    %v2237 = vunpack.c.h.b16 %v2056
    %v2238 = vunpack.c.l.b16 %v2057
    %v2239 = vunpack.c.h.b16 %v2057
    %v2240 = vunpack.c.l.b16 %v2058
    %v2241 = vunpack.c.h.b16 %v2058
    %v2242 = vunpack.c.l.b16 %v2059
    %v2243 = vunpack.c.h.b16 %v2059
    %v2244 = vunpack.c.l.b16 %v2060
    %v2245 = vunpack.c.h.b16 %v2060
    %v2246 = vunpack.c.l.b16 %v2061
    %v2247 = vunpack.c.h.b16 %v2061
    %v2248 = vunpack.c.l.b16 %v2062
    %v2249 = vunpack.c.h.b16 %v2062
    %v2250 = vunpack.c.l.b16 %v2063
    %v2251 = vunpack.c.h.b16 %v2063
    %v2252 = vunpack.c.l.b16 %v2064
    %v2253 = vunpack.c.h.b16 %v2064
    %v2254 = vunpack.c.l.b16 %v2065
    %v2255 = vunpack.c.h.b16 %v2065
    %v2256 = vunpack.c.l.b16 %v2066
    %v2257 = vunpack.c.h.b16 %v2066
    %v2258 = vunpack.c.l.b16 %v2067
    %v2259 = vunpack.c.h.b16 %v2067
    %v2260 = vunpack.c.l.b16 %v2068
    %v2261 = vunpack.c.h.b16 %v2068
    %v2262 = vunpack.c.l.b16 %v2069
    %v2263 = vunpack.c.h.b16 %v2069
    %v2264 = vunpack.c.l.b16 %v2070
    %v2265 = vunpack.c.h.b16 %v2070
    %v2266 = vunpack.c.l.b16 %v2071
    %v2267 = vunpack.c.h.b16 %v2071
    %v2268 = vunpack.c.l.b16 %v2072
    %v2269 = vunpack.c.h.b16 %v2072
    %v2270 = vunpack.c.l.b16 %v2073
    %v2271 = vunpack.c.h.b16 %v2073
    %v2272 = vunpack.c.l.b16 %v2074
    %v2273 = vunpack.c.h.b16 %v2074
    %v2274 = vunpack.c.l.b16 %v2075
    %v2275 = vunpack.c.h.b16 %v2075
    %v2276 = vunpack.c.l.b16 %v2076
    %v2277 = vunpack.c.h.b16 %v2076
    %v2278 = vunpack.c.l.b16 %v2077
    %v2279 = vunpack.c.h.b16 %v2077
    %v2280 = vunpack.c.l.b16 %v2078
    %v2281 = vunpack.c.h.b16 %v2078
    %v2282 = vunpack.c.l.b16 %v2079
    %v2283 = vunpack.c.h.b16 %v2079
    %v2284 = vpack.c.b16 %v2158, %v2156
    %v2285 = vpack.c.b16 %v2159, %v2157
    %v2286 = vpack.c.b16 %v2162, %v2160
    %v2287 = vpack.c.b16 %v2163, %v2161
    %v2288 = vpack.c.b16 %v2166, %v2164
    %v2289 = vpack.c.b16 %v2167, %v2165
    %v2290 = vpack.c.b16 %v2170, %v2168
    %v2291 = vpack.c.b16 %v2171, %v2169
    %v2292 = vpack.c.b16 %v2174, %v2172
    %v2293 = vpack.c.b16 %v2175, %v2173
    %v2294 = vpack.c.b16 %v2178, %v2176
    %v2295 = vpack.c.b16 %v2179, %v2177
    %v2296 = vpack.c.b16 %v2182, %v2180
    %v2297 = vpack.c.b16 %v2183, %v2181
    %v2298 = vpack.c.b16 %v2186, %v2184
    %v2299 = vpack.c.b16 %v2187, %v2185
    %v2300 = vpack.c.b16 %v2190, %v2188
    %v2301 = vpack.c.b16 %v2191, %v2189
    %v2302 = vpack.c.b16 %v2194, %v2192
    %v2303 = vpack.c.b16 %v2195, %v2193
    %v2304 = vpack.c.b16 %v2198, %v2196
    %v2305 = vpack.c.b16 %v2199, %v2197
    %v2306 = vpack.c.b16 %v2202, %v2200
    %v2307 = vpack.c.b16 %v2203, %v2201
    %v2308 = vpack.c.b16 %v2206, %v2204
    %v2309 = vpack.c.b16 %v2207, %v2205
    %v2310 = vpack.c.b16 %v2210, %v2208
    %v2311 = vpack.c.b16 %v2211, %v2209
    %v2312 = vpack.c.b16 %v2214, %v2212
    %v2313 = vpack.c.b16 %v2215, %v2213
    %v2314 = vpack.c.b16 %v2218, %v2216
    %v2315 = vpack.c.b16 %v2219, %v2217
    %v2316 = vpack.c.b16 %v2222, %v2220
    %v2317 = vpack.c.b16 %v2223, %v2221
    %v2318 = vpack.c.b16 %v2226, %v2224
    %v2319 = vpack.c.b16 %v2227, %v2225
    %v2320 = vpack.c.b16 %v2230, %v2228
    %v2321 = vpack.c.b16 %v2231, %v2229
    %v2322 = vpack.c.b16 %v2234, %v2232
    %v2323 = vpack.c.b16 %v2235, %v2233
    %v2324 = vpack.c.b16 %v2238, %v2236
    %v2325 = vpack.c.b16 %v2239, %v2237
    %v2326 = vpack.c.b16 %v2242, %v2240
    %v2327 = vpack.c.b16 %v2243, %v2241
    %v2328 = vpack.c.b16 %v2246, %v2244
    %v2329 = vpack.c.b16 %v2247, %v2245
    %v2330 = vpack.c.b16 %v2250, %v2248
    %v2331 = vpack.c.b16 %v2251, %v2249
    %v2332 = vpack.c.b16 %v2254, %v2252
    %v2333 = vpack.c.b16 %v2255, %v2253
    %v2334 = vpack.c.b16 %v2258, %v2256
    %v2335 = vpack.c.b16 %v2259, %v2257
    %v2336 = vpack.c.b16 %v2262, %v2260
    %v2337 = vpack.c.b16 %v2263, %v2261
    %v2338 = vpack.c.b16 %v2266, %v2264
    %v2339 = vpack.c.b16 %v2267, %v2265
    %v2340 = vpack.c.b16 %v2270, %v2268
    %v2341 = vpack.c.b16 %v2271, %v2269
    %v2342 = vpack.c.b16 %v2274, %v2272
    %v2343 = vpack.c.b16 %v2275, %v2273
    %v2344 = vpack.c.b16 %v2278, %v2276
    %v2345 = vpack.c.b16 %v2279, %v2277
    %v2346 = vpack.c.b16 %v2282, %v2280
    %v2347 = vpack.c.b16 %v2283, %v2281
    %2412 = vmatprep.subr.bf16.mxu0 %v2285
    %2413 = vmatpush1.bf16.msra.mxu0 %v2284
    %2414 = vmatprep.subr.bf16.mxu0 %v2287
    %2415 = vmatpush1.bf16.msra.mxu0 %v2286
    %2416 = vmatprep.subr.bf16.mxu0 %v2289
    %2417 = vmatpush1.bf16.msra.mxu0 %v2288
    %2418 = vmatprep.subr.bf16.mxu0 %v2291
    %2419 = vmatpush1.bf16.msra.mxu0 %v2290
    %2420 = vmatprep.subr.bf16.mxu0 %v2293
    %2421 = vmatpush1.bf16.msra.mxu0 %v2292
    %2422 = vmatprep.subr.bf16.mxu0 %v2295
    %2423 = vmatpush1.bf16.msra.mxu0 %v2294
    %2424 = vmatprep.subr.bf16.mxu0 %v2297
    %2425 = vmatpush1.bf16.msra.mxu0 %v2296
    %2426 = vmatprep.subr.bf16.mxu0 %v2299
    %2427 = vmatpush1.bf16.msra.mxu0 %v2298
    %2428 = vmatprep.subr.bf16.mxu0 %v2301
    %2429 = vmatpush1.bf16.msra.mxu0 %v2300
    %2430 = vmatprep.subr.bf16.mxu0 %v2303
    %2431 = vmatpush1.bf16.msra.mxu0 %v2302
    %2432 = vmatprep.subr.bf16.mxu0 %v2305
    %2433 = vmatpush1.bf16.msra.mxu0 %v2304
    %2434 = vmatprep.subr.bf16.mxu0 %v2307
    %2435 = vmatpush1.bf16.msra.mxu0 %v2306
    %2436 = vmatprep.subr.bf16.mxu0 %v2309
    %2437 = vmatpush1.bf16.msra.mxu0 %v2308
    %2438 = vmatprep.subr.bf16.mxu0 %v2311
    %2439 = vmatpush1.bf16.msra.mxu0 %v2310
    %2440 = vmatprep.subr.bf16.mxu0 %v2313
    %2441 = vmatpush1.bf16.msra.mxu0 %v2312
    %2442 = vmatprep.subr.bf16.mxu0 %v2315
    %2443 = vmatpush1.bf16.msra.mxu0 %v2314
    %2444 = vmatprep.mubr.bf16.mxu0 %v2013
    %2445 = vmatmul.mubr.bf16.gmra.mrb[0].mxu0 %v2012
    %v2446 = vpop.f32.mrb[0].mxu0
    %v2447 = vadd.f32 %v2085, %v2446
    %v2448 = vpop.f32.mrb[0].mxu0
    %v2449 = vadd.f32 %v2089, %v2448
    %v2450 = vpop.f32.mrb[0].mxu0
    %v2451 = vpop.f32.mrb[0].mxu0
    %2452 = vdwg.mxu0
    %2453 = vmatprep.subr.bf16.mxu0 %v2317
    %2454 = vmatpush1.bf16.msra.mxu0 %v2316
    %2455 = vmatprep.subr.bf16.mxu0 %v2319
    %2456 = vmatpush1.bf16.msra.mxu0 %v2318
    %2457 = vmatprep.subr.bf16.mxu0 %v2321
    %2458 = vmatpush1.bf16.msra.mxu0 %v2320
    %2459 = vmatprep.subr.bf16.mxu0 %v2323
    %2460 = vmatpush1.bf16.msra.mxu0 %v2322
    %2461 = vmatprep.subr.bf16.mxu0 %v2325
    %2462 = vmatpush1.bf16.msra.mxu0 %v2324
    %2463 = vmatprep.subr.bf16.mxu0 %v2327
    %2464 = vmatpush1.bf16.msra.mxu0 %v2326
    %2465 = vmatprep.subr.bf16.mxu0 %v2329
    %2466 = vmatpush1.bf16.msra.mxu0 %v2328
    %2467 = vmatprep.subr.bf16.mxu0 %v2331
    %2468 = vmatpush1.bf16.msra.mxu0 %v2330
    %2469 = vmatprep.subr.bf16.mxu0 %v2333
    %2470 = vmatpush1.bf16.msra.mxu0 %v2332
    %2471 = vmatprep.subr.bf16.mxu0 %v2335
    %2472 = vmatpush1.bf16.msra.mxu0 %v2334
    %2473 = vmatprep.subr.bf16.mxu0 %v2337
    %2474 = vmatpush1.bf16.msra.mxu0 %v2336
    %2475 = vmatprep.subr.bf16.mxu0 %v2339
    %2476 = vmatpush1.bf16.msra.mxu0 %v2338
    %2477 = vmatprep.subr.bf16.mxu0 %v2341
    %2478 = vmatpush1.bf16.msra.mxu0 %v2340
    %2479 = vmatprep.subr.bf16.mxu0 %v2343
    %2480 = vmatpush1.bf16.msra.mxu0 %v2342
    %2481 = vmatprep.subr.bf16.mxu0 %v2345
    %2482 = vmatpush1.bf16.msra.mxu0 %v2344
    %2483 = vmatprep.subr.bf16.mxu0 %v2347
    %2484 = vmatpush1.bf16.msra.mxu0 %v2346
    %2485 = vmatprep.mubr.bf16.mxu0 %v2015
    %2486 = vmatmul.mubr.bf16.gmra.mrb[0].mxu0 %v2014
    %v2487 = vpop.f32.mrb[0].mxu0
    %v2488 = vadd.f32 %v2447, %v2487
    %v2489 = vpop.f32.mrb[0].mxu0
    %v2490 = vadd.f32 %v2449, %v2489
    %v2491 = vpop.f32.mrb[0].mxu0
    %v2492 = vpop.f32.mrb[0].mxu0
    %2493 = vdwg.mxu0
    %v2494 = vmax.f32 %v2488, 0.0
    %v2495 = vmax.f32 %v2490, 0.0
    %v2496 = vpack.c.bf16 %v2494, %v2494
    %v2497 = vpack.c.bf16 %v2495, %v2495
    %v2498 = vld [vmem:[%s6] sm:$0xf]
    %v2499 = vld [vmem:[%s6 + $0x4] sm:$0xf]
    %v2500 = vld [vmem:[%s6 + $0x8] sm:$0xf]
    %v2501 = vld [vmem:[%s6 + $0xc] sm:$0xf]
    %v2502 = vld [vmem:[%s6 + $0x10] sm:$0xf]
    %v2503 = vld [vmem:[%s6 + $0x14] sm:$0xf]
    %v2504 = vld [vmem:[%s6 + $0x18] sm:$0xf]
    %v2505 = vld [vmem:[%s6 + $0x1c] sm:$0xf]
    %v2506 = vld [vmem:[%s6 + $0x20] sm:$0xf]
    %v2507 = vld [vmem:[%s6 + $0x24] sm:$0xf]
    %v2508 = vld [vmem:[%s6 + $0x28] sm:$0xf]
    %v2509 = vld [vmem:[%s6 + $0x2c] sm:$0xf]
    %v2510 = vld [vmem:[%s6 + $0x30] sm:$0xf]
    %v2511 = vld [vmem:[%s6 + $0x34] sm:$0xf]
    %v2512 = vld [vmem:[%s6 + $0x38] sm:$0xf]
    %v2513 = vld [vmem:[%s6 + $0x3c] sm:$0xf]
    %v2514 = vld [vmem:[%s6 + $0x40] sm:$0xf]
    %v2515 = vld [vmem:[%s6 + $0x44] sm:$0xf]
    %v2516 = vld [vmem:[%s6 + $0x48] sm:$0xf]
    %v2517 = vld [vmem:[%s6 + $0x4c] sm:$0xf]
    %v2518 = vld [vmem:[%s6 + $0x50] sm:$0xf]
    %v2519 = vld [vmem:[%s6 + $0x54] sm:$0xf]
    %v2520 = vld [vmem:[%s6 + $0x58] sm:$0xf]
    %v2521 = vld [vmem:[%s6 + $0x5c] sm:$0xf]
    %v2522 = vld [vmem:[%s6 + $0x60] sm:$0xf]
    %v2523 = vld [vmem:[%s6 + $0x64] sm:$0xf]
    %v2524 = vld [vmem:[%s6 + $0x68] sm:$0xf]
    %v2525 = vld [vmem:[%s6 + $0x6c] sm:$0xf]
    %v2526 = vld [vmem:[%s6 + $0x70] sm:$0xf]
    %v2527 = vld [vmem:[%s6 + $0x74] sm:$0xf]
    %v2528 = vld [vmem:[%s6 + $0x78] sm:$0xf]
    %v2529 = vld [vmem:[%s6 + $0x7c] sm:$0xf]
    %v2530 = vld [vmem:[%s7] sm:$0x1]
    %v2532 = vlaneseq
    %v2533 = vshrl.u32 %v2532, 7
    %v2534 = vsub.s32 0, %v2533
    %v2535 = vrot.slane %v2530, %v2534
    %v2569 = vunpack.c.l.b16 %v2498
    %v2570 = vunpack.c.l.b16 %v2499
    %v2571 = vunpack.c.l.b16 %v2500
    %v2572 = vunpack.c.l.b16 %v2501
    %v2573 = vunpack.c.l.b16 %v2502
    %v2574 = vunpack.c.l.b16 %v2503
    %v2575 = vunpack.c.l.b16 %v2504
    %v2576 = vunpack.c.l.b16 %v2505
    %v2577 = vunpack.c.l.b16 %v2506
    %v2578 = vunpack.c.l.b16 %v2507
    %v2579 = vunpack.c.l.b16 %v2508
    %v2580 = vunpack.c.l.b16 %v2509
    %v2581 = vunpack.c.l.b16 %v2510
    %v2582 = vunpack.c.l.b16 %v2511
    %v2583 = vunpack.c.l.b16 %v2512
    %v2584 = vunpack.c.l.b16 %v2513
    %v2585 = vunpack.c.l.b16 %v2514
    %v2586 = vunpack.c.l.b16 %v2515
    %v2587 = vunpack.c.l.b16 %v2516
    %v2588 = vunpack.c.l.b16 %v2517
    %v2589 = vunpack.c.l.b16 %v2518
    %v2590 = vunpack.c.l.b16 %v2519
    %v2591 = vunpack.c.l.b16 %v2520
    %v2592 = vunpack.c.l.b16 %v2521
    %v2593 = vunpack.c.l.b16 %v2522
    %v2594 = vunpack.c.l.b16 %v2523
    %v2595 = vunpack.c.l.b16 %v2524
    %v2596 = vunpack.c.l.b16 %v2525
    %v2597 = vunpack.c.l.b16 %v2526
    %v2598 = vunpack.c.l.b16 %v2527
    %v2599 = vunpack.c.l.b16 %v2528
    %v2600 = vunpack.c.l.b16 %v2529
    %v2601 = vpack.c.b16 %v2570, %v2569
    %v2602 = vpack.c.b16 %v2572, %v2571
    %v2603 = vpack.c.b16 %v2574, %v2573
    %v2604 = vpack.c.b16 %v2576, %v2575
    %v2605 = vpack.c.b16 %v2578, %v2577
    %v2606 = vpack.c.b16 %v2580, %v2579
    %v2607 = vpack.c.b16 %v2582, %v2581
    %v2608 = vpack.c.b16 %v2584, %v2583
    %v2609 = vpack.c.b16 %v2586, %v2585
    %v2610 = vpack.c.b16 %v2588, %v2587
    %v2611 = vpack.c.b16 %v2590, %v2589
    %v2612 = vpack.c.b16 %v2592, %v2591
    %v2613 = vpack.c.b16 %v2594, %v2593
    %v2614 = vpack.c.b16 %v2596, %v2595
    %v2615 = vpack.c.b16 %v2598, %v2597
    %v2616 = vpack.c.b16 %v2600, %v2599
    %2633 = vmatprep.subr.bf16.mxu0 0
    %2634 = vmatpush1.bf16.msra.mxu0 %v2601
    %2635 = vmatprep.subr.bf16.mxu0 0
    %2636 = vmatpush1.bf16.msra.mxu0 %v2602
    %2637 = vmatprep.subr.bf16.mxu0 0
    %2638 = vmatpush1.bf16.msra.mxu0 %v2603
    %2639 = vmatprep.subr.bf16.mxu0 0
    %2640 = vmatpush1.bf16.msra.mxu0 %v2604
    %2641 = vmatprep.subr.bf16.mxu0 0
    %2642 = vmatpush1.bf16.msra.mxu0 %v2605
    %2643 = vmatprep.subr.bf16.mxu0 0
    %2644 = vmatpush1.bf16.msra.mxu0 %v2606
    %2645 = vmatprep.subr.bf16.mxu0 0
    %2646 = vmatpush1.bf16.msra.mxu0 %v2607
    %2647 = vmatprep.subr.bf16.mxu0 0
    %2648 = vmatpush1.bf16.msra.mxu0 %v2608
    %2649 = vmatprep.subr.bf16.mxu0 0
    %2650 = vmatpush1.bf16.msra.mxu0 %v2609
    %2651 = vmatprep.subr.bf16.mxu0 0
    %2652 = vmatpush1.bf16.msra.mxu0 %v2610
    %2653 = vmatprep.subr.bf16.mxu0 0
    %2654 = vmatpush1.bf16.msra.mxu0 %v2611
    %2655 = vmatprep.subr.bf16.mxu0 0
    %2656 = vmatpush1.bf16.msra.mxu0 %v2612
    %2657 = vmatprep.subr.bf16.mxu0 0
    %2658 = vmatpush1.bf16.msra.mxu0 %v2613
    %2659 = vmatprep.subr.bf16.mxu0 0
    %2660 = vmatpush1.bf16.msra.mxu0 %v2614
    %2661 = vmatprep.subr.bf16.mxu0 0
    %2662 = vmatpush1.bf16.msra.mxu0 %v2615
    %2663 = vmatprep.subr.bf16.mxu0 0
    %2664 = vmatpush1.bf16.msra.mxu0 %v2616
    %2665 = vmatprep.mubr.bf16.mxu0 %v2497
    %2666 = vmatmul.mubr.bf16.gmra.mrb[0].mxu0 %v2496
    %v2667 = vpop.f32.mrb[0].mxu0
    %v2668 = vadd.f32 %v2535, %v2667
    %v2669 = vpop.f32.mrb[0].mxu0
    %v2670 = vpop.f32.mrb[0].mxu0
    %v2671 = vpop.f32.mrb[0].mxu0
    %2672 = vdwg.mxu0
    %v2673 = vld [vmem:[%s1] sm:$0x3]
    %v2674 = vpack.c.bf16 %v2673, %v2673
    %v2675 = vld [vmem:[%s8] sm:$0xf]
    %v2676 = vld [vmem:[%s8 + $0x4] sm:$0xf]
    %v2677 = vld [vmem:[%s8 + $0x8] sm:$0xf]
    %v2678 = vld [vmem:[%s8 + $0xc] sm:$0xf]
    %v2679 = vpack.c.bf16 %v2668, %v2668
    %v2680 = vld [vmem:[%s9] sm:$0xf]
    %v2681 = vld [vmem:[%s9 + $0x4] sm:$0xf]
    %v2682 = vld [vmem:[%s9 + $0x8] sm:$0xf]
    %v2683 = vld [vmem:[%s9 + $0xc] sm:$0xf]
    %v2688 = vunpack.c.l.b16 %v2680
    %v2689 = vunpack.c.l.b16 %v2681
    %v2690 = vunpack.c.l.b16 %v2682
    %v2691 = vunpack.c.l.b16 %v2683
    %v2692 = vpack.c.b16 %v2689, %v2688
    %v2693 = vpack.c.b16 %v2691, %v2690
    %vm2696 = vcmask 261120
    %v2698 = vsel %vm2696, %v2679, 0
    %2700 = vmatprep.subr.bf16.mxu0 0
    %2701 = vmatpush1.bf16.msra.mxu0 %v2692
    %2702 = vmatprep.subr.bf16.mxu0 0
    %2703 = vmatpush1.bf16.msra.mxu0 %v2693
    %2704 = vmatprep.subr.bf16.mxu0 0
    %2705 = vmatpush1.bf16.msra.mxu0 0
    %2706 = vmatprep.subr.bf16.mxu0 0
    %2707 = vmatpush1.bf16.msra.mxu0 0
    %2708 = vmatprep.subr.bf16.mxu0 0
    %2709 = vmatpush1.bf16.msra.mxu0 0
    %2710 = vmatprep.subr.bf16.mxu0 0
    %2711 = vmatpush1.bf16.msra.mxu0 0
    %2712 = vmatprep.subr.bf16.mxu0 0
    %2713 = vmatpush1.bf16.msra.mxu0 0
    %2714 = vmatprep.subr.bf16.mxu0 0
    %2715 = vmatpush1.bf16.msra.mxu0 0
    %2716 = vmatprep.subr.bf16.mxu0 0
    %2717 = vmatpush1.bf16.msra.mxu0 0
    %2718 = vmatprep.subr.bf16.mxu0 0
    %2719 = vmatpush1.bf16.msra.mxu0 0
    %2720 = vmatprep.subr.bf16.mxu0 0
    %2721 = vmatpush1.bf16.msra.mxu0 0
    %2722 = vmatprep.subr.bf16.mxu0 0
    %2723 = vmatpush1.bf16.msra.mxu0 0
    %2724 = vmatprep.subr.bf16.mxu0 0
    %2725 = vmatpush1.bf16.msra.mxu0 0
    %2726 = vmatprep.subr.bf16.mxu0 0
    %2727 = vmatpush1.bf16.msra.mxu0 0
    %2728 = vmatprep.subr.bf16.mxu0 0
    %2729 = vmatpush1.bf16.msra.mxu0 0
    %2730 = vmatprep.subr.bf16.mxu0 0
    %2731 = vmatpush1.bf16.msra.mxu0 0
    %2732 = vmatprep.mubr.bf16.mxu0 0
    %2733 = vmatmul.mubr.bf16.gmra.mrb[0].mxu0 %v2698
    %v2734 = vpop.f32.mrb[0].mxu0
    %v2735 = vadd.f32 0.0, %v2734
    %v2736 = vpop.f32.mrb[0].mxu0
    %v2737 = vpop.f32.mrb[0].mxu0
    %v2738 = vpop.f32.mrb[0].mxu0
    %2739 = vdwg.mxu0
    %v2744 = vunpack.c.l.b16 %v2675
    %v2745 = vunpack.c.l.b16 %v2676
    %v2746 = vunpack.c.l.b16 %v2677
    %v2747 = vunpack.c.l.b16 %v2678
    %v2748 = vpack.c.b16 %v2745, %v2744
    %v2749 = vpack.c.b16 %v2747, %v2746
    %v2753 = vsel %vm2696, %v2674, 0
    %2755 = vmatprep.subr.bf16.mxu0 0
    %2756 = vmatpush1.bf16.msra.mxu0 %v2748
    %2757 = vmatprep.subr.bf16.mxu0 0
    %2758 = vmatpush1.bf16.msra.mxu0 %v2749
    %2759 = vmatprep.subr.bf16.mxu0 0
    %2760 = vmatpush1.bf16.msra.mxu0 0
    %2761 = vmatprep.subr.bf16.mxu0 0
    %2762 = vmatpush1.bf16.msra.mxu0 0
    %2763 = vmatprep.subr.bf16.mxu0 0
    %2764 = vmatpush1.bf16.msra.mxu0 0
    %2765 = vmatprep.subr.bf16.mxu0 0
    %2766 = vmatpush1.bf16.msra.mxu0 0
    %2767 = vmatprep.subr.bf16.mxu0 0
    %2768 = vmatpush1.bf16.msra.mxu0 0
    %2769 = vmatprep.subr.bf16.mxu0 0
    %2770 = vmatpush1.bf16.msra.mxu0 0
    %2771 = vmatprep.subr.bf16.mxu0 0
    %2772 = vmatpush1.bf16.msra.mxu0 0
    %2773 = vmatprep.subr.bf16.mxu0 0
    %2774 = vmatpush1.bf16.msra.mxu0 0
    %2775 = vmatprep.subr.bf16.mxu0 0
    %2776 = vmatpush1.bf16.msra.mxu0 0
    %2777 = vmatprep.subr.bf16.mxu0 0
    %2778 = vmatpush1.bf16.msra.mxu0 0
    %2779 = vmatprep.subr.bf16.mxu0 0
    %2780 = vmatpush1.bf16.msra.mxu0 0
    %2781 = vmatprep.subr.bf16.mxu0 0
    %2782 = vmatpush1.bf16.msra.mxu0 0
    %2783 = vmatprep.subr.bf16.mxu0 0
    %2784 = vmatpush1.bf16.msra.mxu0 0
    %2785 = vmatprep.subr.bf16.mxu0 0
    %2786 = vmatpush1.bf16.msra.mxu0 0
    %2787 = vmatprep.mubr.bf16.mxu0 0
    %2788 = vmatmul.mubr.bf16.gmra.mrb[0].mxu0 %v2753
    %v2789 = vpop.f32.mrb[0].mxu0
    %v2790 = vadd.f32 %v2735, %v2789
    %v2791 = vpop.f32.mrb[0].mxu0
    %v2792 = vpop.f32.mrb[0].mxu0
    %v2793 = vpop.f32.mrb[0].mxu0
    %2794 = vdwg.mxu0
    %v2795 = vld [vmem:[%s10] sm:$0x1]
    %v2797 = vlaneseq
    %v2798 = vshrl.u32 %v2797, 7
    %v2799 = vsub.s32 0, %v2798
    %v2800 = vrot.slane %v2795, %v2799
    %v2802 = vadd.f32 %v2790, %v2800
    %v2803 = vmax.f32 %v2802, 0.0
    %vm2804 = vcmask 263168
    %2805 = vst.msk [vmem:[#allocation7] sm:$0x3] %vm2804, %v2803
    // Predicated region
    $region54: #{image_state_projector_forward.1} parent=1 // pred_check
      _
    $region55: #{image_state_projector_forward.1} parent=1 // pred_check_branch
      %2807 = sbr.rel (0) target = $region57
    $region56: #{image_state_projector_forward.1} parent=1 // pred_region
      %s2809 = ssub.s32 32, 32
      %2810 = vsyncadd [#allocation4], %s2809
      %s2812 = sshll.u32 [#allocation7], 4
      %s2813 = int_to_ptr.vmem [resolvable:$true] %s2812
      %2815 = dma.vmem_to_hbm [thread:$0]  %s2813, 32, %s11, [#allocation4]
    $region57: #{image_state_projector_forward.1} parent=1 // pred_fallthru
      _
    // Predicated region
    $region58: #{image_state_projector_forward.1} parent=1 // pred_check
      _
    $region59: #{image_state_projector_forward.1} parent=1 // pred_check_branch
      %2817 = sbr.rel (0) target = $region61
    $region60: #{image_state_projector_forward.1} parent=1 // pred_region
      %2818 = dma.done [#allocation4], 32
    $region61: #{image_state_projector_forward.1} parent=1 // pred_fallthru
      _
    %2819 = vsyncpa [#allocation3], 1
    %2820 = vsyncpa [#allocation6], 1
    %2821 = vsyncpa [#allocation4], 1

</llo_original>
